<compile_context>
chip_gen: v7x
topology: tpu7x:2x2x1
jax: 0.10.0
libtpu: 0.0.40
codegen_flags: <defaults>
</compile_context>

<pallas_src>
import math
import functools

import jax
import jax.numpy as jnp
from jax.experimental import pallas as pl
from jax.experimental.pallas import tpu as pltpu

# MXU is bf16-native on v5e/v6e/v7x; accumulation stays f32 via
# preferred_element_type.  (The "no bf16 VPU on v5e" caveat only affects the
# vector unit, which we keep in f32 anyway.)
MATMUL_DTYPE = jnp.bfloat16


# ----------------------------------------------------------------------------
# Fused all-layers encoder Pallas kernel
# ----------------------------------------------------------------------------

def _encoder_layers_kernel(
    x_ref,                       # (T, D)        embeddings (+pos enc) for this batch element
    w_qkvg_ref, b_qkvg_ref,      # (D, 3D+Hd), (1, 3D+Hd)   Wq|Wk|Wv|attn_gate.l1 (q pre-scaled)
    w_ag2_ref, b_ag2_ref,        # (Hd, D), (1, D)          attn_gate.l2
    w_o_ref, b_o_ref,            # (H, dh, D), (1, D)       wo (pre-split per head)
    gamma1_ref, beta1_ref,       # (1, D)                   attn layernorm
    w_gf1_ref, b_gf1_ref,        # (D, 2Hd), (1, 2Hd)       ff_gate.l1 | ff.l1
    w_fg2_ref, b_fg2_ref,        # (Hd, D), (1, D)          ff_gate.l2
    w_f2_ref, b_f2_ref,          # (Hd, D), (1, D)          ff.l2
    gamma2_ref, beta2_ref,       # (1, D)                   ff layernorm
    o_ref,                       # (T, D)        this layer's output block
    x_carry,                     # VMEM scratch (T, D) f32 — activation carried across layers
    *, n_heads, d_model, d_hidden, eps,
):
    D, Hd, H = d_model, d_hidden, n_heads
    dh = D // H

    # Layer 0 of each batch element: load the embedding tile into the carry.
    @pl.when(pl.program_id(1) == 0)
    def _():
        x_carry[...] = x_ref[...].astype(jnp.float32)

    x = x_carry[...]

    def mm(a, w_ref, b_ref):
        # bf16 MXU matmul, f32 accumulation, f32 bias add.
        return (jnp.dot(a.astype(MATMUL_DTYPE), w_ref[...],
                        preferred_element_type=jnp.float32)
                + b_ref[...].astype(jnp.float32))

    def highway_norm(x_in, gate_pre, layer_out, gamma, beta):
        # HighwayBlock: h = x*sigmoid(gate) + layer_out*(1-sigmoid(gate))
        # LayerNorm (torch semantics): gamma * (h - mean) / (std_unbiased + eps) + beta
        g = jax.nn.sigmoid(gate_pre)
        h = x_in * g + layer_out * (1.0 - g)
        mean = jnp.mean(h, axis=-1, keepdims=True)
        c = h - mean
        var = jnp.sum(c * c, axis=-1, keepdims=True) * (1.0 / (D - 1))  # unbiased (torch .std())
        inv = 1.0 / (jnp.sqrt(var) + eps)   # exact: layernorm error compounds across layers
        return gamma * (c * inv) + beta

    # ---- self-attention block ----------------------------------------------
    # Fused [ q | k | v | attn_gate hidden ] projection: one lane-dense MXU pass.
    # The 1/sqrt(d_model) score scale is pre-folded into the q columns host-side.
    qkvg = mm(x, w_qkvg_ref, b_qkvg_ref)                               # [T, 3D+Hd] f32
    gate_pre = mm(jnp.maximum(qkvg[:, 3 * D:], 0.0), w_ag2_ref, b_ag2_ref)

    # Split heads once into a leading (batch) axis and run batched MXU einsums
    # (one push per stage instead of n_heads tiny [T,dh]x[dh,T] matmuls).
    def split_heads(y):                                                # [T, D] -> [H, T, dh]
        return jnp.stack([y[:, h * dh:(h + 1) * dh] for h in range(H)], axis=0)

    qh = split_heads(qkvg[:, 0:D]).astype(MATMUL_DTYPE)
    kh = split_heads(qkvg[:, D:2 * D]).astype(MATMUL_DTYPE)
    vh = split_heads(qkvg[:, 2 * D:3 * D]).astype(MATMUL_DTYPE)

    # TODO(synk): padding `mask` not applied (forward is exercised with mask=None).
    s = jnp.einsum("hqd,hkd->hqk", qh, kh,
                   preferred_element_type=jnp.float32)                 # [H, T, T]
    m = jnp.max(s, axis=-1, keepdims=True)
    p = jnp.exp(s - m)
    denom = jnp.sum(p, axis=-1, keepdims=True)
    p = p * pl.reciprocal(denom, approx=True)                          # EUP slot, off the VPU
    oh = jnp.einsum("hqk,hkd->hqd", p.astype(MATMUL_DTYPE), vh,
                    preferred_element_type=jnp.float32)                # [H, T, dh]

    # concat(heads) @ wo == sum_h oh[h] @ wo[h]; w_o is pre-reshaped to [H, dh, D].
    attn_heads = jnp.einsum("hqd,hdk->hqk", oh.astype(MATMUL_DTYPE), w_o_ref[...],
                            preferred_element_type=jnp.float32)        # [H, T, D]
    attn_out = jnp.sum(attn_heads, axis=0) + b_o_ref[...]              # bias hoisted out

    x1 = highway_norm(x, gate_pre, attn_out, gamma1_ref[...], beta1_ref[...])

    # ---- feed-forward block --------------------------------------------------
    # Fused [ ff_gate hidden | ff hidden ] projection (128-wide lane-dense output).
    gf = jnp.maximum(mm(x1, w_gf1_ref, b_gf1_ref), 0.0)                # [T, 2*Hd]
    gate_pre2 = mm(gf[:, :Hd], w_fg2_ref, b_fg2_ref)
    ff_out = mm(gf[:, Hd:], w_f2_ref, b_f2_ref)

    out = highway_norm(x1, gate_pre2, ff_out, gamma2_ref[...], beta2_ref[...])

    x_carry[...] = out                       # carry to the next layer
    o_ref[...] = out.astype(o_ref.dtype)     # emit this layer's encoding


# ----------------------------------------------------------------------------
# Pallas wrapper: one call for all layers, grid = (batch, layer)
# ----------------------------------------------------------------------------

_PARAM_ORDER = ("w_qkvg", "b_qkvg", "w_ag2", "b_ag2", "w_o", "b_o",
                "gamma1", "beta1", "w_gf1", "b_gf1", "w_fg2", "b_fg2",
                "w_f2", "b_f2", "gamma2", "beta2")


def encoder_apply_all_layers(packed, x, *, n_heads, d_model, d_hidden, eps=1e-6,
                             vmem_limit_bytes=56 * 1024 * 1024):
    """x: [B, T, D]; packed: dict of [L, ...] stacked layer params.

    Returns [L, B, T, D] with the output of every layer.
    """
    B, T, D = x.shape
    weights = [packed[name] for name in _PARAM_ORDER]
    L = weights[0].shape[0]

    def wspec(arr):
        # Weights vary with the layer grid axis; the default double-buffered
        # BlockSpec pipelining prefetches layer l+1's weights under layer l's
        # compute.  (At realistic D, drop to bf16 — already done — and shrink
        # buffering / tile K if the weight set stops fitting VMEM.)
        zeros = (0,) * (arr.ndim - 1)
        return pl.BlockSpec((pl.Squeezed(),) + tuple(arr.shape[1:]),
                            lambda b, l: (l,) + zeros)

    kernel = functools.partial(
        _encoder_layers_kernel,
        n_heads=n_heads, d_model=d_model, d_hidden=d_hidden, eps=eps)

    # TODO(synk): at realistic T, add a q-row tile grid axis + flash-style kv loop.
    return pl.pallas_call(
        kernel,
        out_shape=jax.ShapeDtypeStruct((L, B, T, D), x.dtype),
        grid=(B, L),
        in_specs=[pl.BlockSpec((pl.Squeezed(), T, D), lambda b, l: (b, 0, 0))]
                 + [wspec(w) for w in weights],
        out_specs=pl.BlockSpec((pl.Squeezed(), pl.Squeezed(), T, D),
                               lambda b, l: (l, b, 0, 0)),
        scratch_shapes=[pltpu.VMEM((T, D), jnp.float32)],   # cross-layer activation carry
        compiler_params=pltpu.CompilerParams(
            dimension_semantics=("parallel", "arbitrary"),
            vmem_limit_bytes=vmem_limit_bytes),
    )(x, *weights)


# ----------------------------------------------------------------------------
# Parameter setup / packing and model glue (plain JAX)
# ----------------------------------------------------------------------------

def positional_encodings(T, D):
    positions = jnp.arange(T, dtype=jnp.float32)
    channels = jnp.arange(0, D, 2, dtype=jnp.float32) / D
    channels = 1.0 / (10000.0 ** channels)
    enc = positions[:, None] * channels[None, :]               # [T, D/2]
    enc = jnp.stack([jnp.sin(enc), jnp.cos(enc)], axis=-1)     # [T, D/2, 2]
    return enc.reshape(T, D)                                   # interleaved sin/cos


def _uniform_w(key, d_in, d_out):
    stdv = 1.0 / math.sqrt(d_in)
    return jax.random.uniform(key, (d_in, d_out), jnp.float32, -stdv, stdv)


def init_encoder_layer(key, d_model, d_hidden):
    ks = jax.random.split(key, 10)
    z = lambda n: jnp.zeros((1, n), jnp.float32)
    return {
        "wq": _uniform_w(ks[0], d_model, d_model), "bq": z(d_model),
        "wk": _uniform_w(ks[1], d_model, d_model), "bk": z(d_model),
        "wv": _uniform_w(ks[2], d_model, d_model), "bv": z(d_model),
        "wo": _uniform_w(ks[3], d_model, d_model), "bo": z(d_model),
        "w_ag1": _uniform_w(ks[4], d_model, d_hidden), "b_ag1": z(d_hidden),
        "w_ag2": _uniform_w(ks[5], d_hidden, d_model), "b_ag2": z(d_model),
        "w_fg1": _uniform_w(ks[6], d_model, d_hidden), "b_fg1": z(d_hidden),
        "w_fg2": _uniform_w(ks[7], d_hidden, d_model), "b_fg2": z(d_model),
        "w_f1": _uniform_w(ks[8], d_model, d_hidden), "b_f1": z(d_hidden),
        "w_f2": _uniform_w(ks[9], d_hidden, d_model), "b_f2": z(d_model),
        "gamma1": jnp.ones((1, d_model), jnp.float32), "beta1": z(d_model),
        "gamma2": jnp.ones((1, d_model), jnp.float32), "beta2": z(d_model),
    }


def init_encoder(key, vocab, d_model, d_hidden, n_layers):
    kemb, *klayers = jax.random.split(key, n_layers + 1)
    return {
        "embed": jax.random.normal(kemb, (vocab, d_model), jnp.float32),
        "layers": [init_encoder_layer(k, d_model, d_hidden) for k in klayers],
    }


def pack_encoder_params(params, *, d_model, d_hidden, n_heads, w_dtype=MATMUL_DTYPE):
    """Pack natural per-layer params into stacked [L, ...] kernel weights.

    - concatenates Wq|Wk|Wv|attn_gate.l1 and ff_gate.l1|ff.l1,
    - folds the 1/sqrt(d_model) attention scale into the q weights/bias,
    - pre-splits wo per head to [H, dh, D],
    - stores matmul weights in bf16 (biases / gamma / beta stay f32).
    """
    D, Hd, H = d_model, d_hidden, n_heads
    dh = D // H
    inv_scale = 1.0 / math.sqrt(D)   # Attention is built with d_key = d_model in the reference
    per_layer = []
    for lp in params["layers"]:
        per_layer.append({
            "w_qkvg": jnp.concatenate(
                [lp["wq"] * inv_scale, lp["wk"], lp["wv"], lp["w_ag1"]], axis=1).astype(w_dtype),
            "b_qkvg": jnp.concatenate(
                [lp["bq"] * inv_scale, lp["bk"], lp["bv"], lp["b_ag1"]], axis=1),
            "w_ag2": lp["w_ag2"].astype(w_dtype), "b_ag2": lp["b_ag2"],
            "w_o": lp["wo"].reshape(H, dh, D).astype(w_dtype), "b_o": lp["bo"],
            "gamma1": lp["gamma1"], "beta1": lp["beta1"],
            "w_gf1": jnp.concatenate([lp["w_fg1"], lp["w_f1"]], axis=1).astype(w_dtype),
            "b_gf1": jnp.concatenate([lp["b_fg1"], lp["b_f1"]], axis=1),
            "w_fg2": lp["w_fg2"].astype(w_dtype), "b_fg2": lp["b_fg2"],
            "w_f2": lp["w_f2"].astype(w_dtype), "b_f2": lp["b_f2"],
            "gamma2": lp["gamma2"], "beta2": lp["beta2"],
        })
    return {k: jnp.stack([layer[k] for layer in per_layer], axis=0) for k in per_layer[0]}


def encoder_forward(params, tokens, *, n_heads, d_model, d_hidden):
    B, T = tokens.shape
    x = jnp.take(params["embed"], tokens, axis=0)                 # [B, T, D]
    x = x + positional_encodings(T, d_model)[None, :, :]
    # dropout: identity
    packed = pack_encoder_params(params, d_model=d_model, d_hidden=d_hidden, n_heads=n_heads)
    layer_outs = encoder_apply_all_layers(packed, x, n_heads=n_heads,
                                          d_model=d_model, d_hidden=d_hidden)
    return [x] + [layer_outs[i] for i in range(layer_outs.shape[0])]


# ----------------------------------------------------------------------------
# Pure-JAX reference (mirrors the PyTorch math; matmul operands cast to
# MATMUL_DTYPE to reflect the kernel's bf16-MXU / f32-accumulate contract)
# ----------------------------------------------------------------------------

def encoder_forward_ref(params, tokens, *, n_heads, d_model, d_hidden):
    B, T = tokens.shape
    D, Hd, H = d_model, d_hidden, n_heads
    dh = D // H
    scale = math.sqrt(D)
    eps = 1e-6
    cast = lambda a: a.astype(MATMUL_DTYPE)

    def mmr(a, w, b):
        return jnp.dot(cast(a), cast(w), preferred_element_type=jnp.float32) + b

    def ln(h, gamma, beta):
        mean = h.mean(-1, keepdims=True)
        c = h - mean
        std = jnp.sqrt((c * c).sum(-1, keepdims=True) / (D - 1))
        return gamma * c / (std + eps) + beta

    x = jnp.take(params["embed"], tokens, axis=0) + positional_encodings(T, D)[None]
    enc = [x]
    for lp in params["layers"]:
        x2 = x.reshape(B * T, D)
        gate_pre = mmr(jnp.maximum(mmr(x2, lp["w_ag1"], lp["b_ag1"]), 0.0),
                       lp["w_ag2"], lp["b_ag2"])
        q = mmr(x2, lp["wq"], lp["bq"]).reshape(B, T, H, dh)
        k = mmr(x2, lp["wk"], lp["bk"]).reshape(B, T, H, dh)
        v = mmr(x2, lp["wv"], lp["bv"]).reshape(B, T, H, dh)
        s = jnp.einsum("bqhd,bkhd->bhqk", cast(q), cast(k),
                       preferred_element_type=jnp.float32) / scale
        p = jax.nn.softmax(s, axis=-1)
        o = jnp.einsum("bhqk,bkhd->bqhd", cast(p), cast(v),
                       preferred_element_type=jnp.float32).reshape(B * T, D)
        attn_out = mmr(o, lp["wo"], lp["bo"])
        g = jax.nn.sigmoid(gate_pre)
        x2 = ln(x2 * g + attn_out * (1.0 - g), lp["gamma1"], lp["beta1"])

        gate_pre2 = mmr(jnp.maximum(mmr(x2, lp["w_fg1"], lp["b_fg1"]), 0.0),
                        lp["w_fg2"], lp["b_fg2"])
        ff = mmr(jnp.maximum(mmr(x2, lp["w_f1"], lp["b_f1"]), 0.0), lp["w_f2"], lp["b_f2"])
        g2 = jax.nn.sigmoid(gate_pre2)
        x2 = ln(x2 * g2 + ff * (1.0 - g2), lp["gamma2"], lp["beta2"])
        x = x2.reshape(B, T, D)
        enc.append(x)
    return enc


# ----------------------------------------------------------------------------
# Main
# ----------------------------------------------------------------------------

if __name__ == "__main__":
    # NOTE: toy shapes (D=32, T=8) are lane-sparse; the kernel is written so the
    # same structure scales when D is a multiple of 128 and T grows.
    B, T = 2, 8
    vocab = 50
    d_model, d_hidden = 32, 64
    n_heads, n_layers = 4, 2

    key = jax.random.PRNGKey(0)
    kp, kt = jax.random.split(key)
    params = init_encoder(kp, vocab, d_model, d_hidden, n_layers)
    tokens = jax.random.randint(kt, (B, T), 0, vocab, dtype=jnp.int32)

    fwd = jax.jit(functools.partial(encoder_forward, n_heads=n_heads,
                                    d_model=d_model, d_hidden=d_hidden))
    encoding = fwd(params, tokens)
    encoding = [jax.block_until_ready(e) for e in encoding]

    assert len(encoding) == n_layers + 1
    assert all(e.shape == (B, T, d_model) for e in encoding)

    # Sanity-check against the pure-JAX reference (tolerance covers the
    # softmax approx-reciprocal, bf16 rounding placement, and accumulation-order
    # differences across two layers).
    ref = encoder_forward_ref(params, tokens, n_heads=n_heads,
                              d_model=d_model, d_hidden=d_hidden)
    for a, b in zip(encoding, ref):
        err = float(jnp.max(jnp.abs(a - b)))
        assert err < 5e-2, f"max abs err {err}"

    print("KERNEL_OK")
</pallas_src>

<mosaic_0001>
module attributes {stable_mosaic.version = 11 : i64} {
  func.func @_encoder_layers_kernel(%arg0: i32, %arg1: i32, %arg2: memref<1x8x32xf32, #tpu.memory_space<vmem>>, %arg3: memref<1x32x160xbf16, #tpu.memory_space<vmem>>, %arg4: memref<1x1x160xf32, #tpu.memory_space<vmem>>, %arg5: memref<1x64x32xbf16, #tpu.memory_space<vmem>>, %arg6: memref<1x1x32xf32, #tpu.memory_space<vmem>>, %arg7: memref<1x4x8x32xbf16, #tpu.memory_space<vmem>>, %arg8: memref<1x1x32xf32, #tpu.memory_space<vmem>>, %arg9: memref<1x1x32xf32, #tpu.memory_space<vmem>>, %arg10: memref<1x1x32xf32, #tpu.memory_space<vmem>>, %arg11: memref<1x32x128xbf16, #tpu.memory_space<vmem>>, %arg12: memref<1x1x128xf32, #tpu.memory_space<vmem>>, %arg13: memref<1x64x32xbf16, #tpu.memory_space<vmem>>, %arg14: memref<1x1x32xf32, #tpu.memory_space<vmem>>, %arg15: memref<1x64x32xbf16, #tpu.memory_space<vmem>>, %arg16: memref<1x1x32xf32, #tpu.memory_space<vmem>>, %arg17: memref<1x1x32xf32, #tpu.memory_space<vmem>>, %arg18: memref<1x1x32xf32, #tpu.memory_space<vmem>>, %arg19: memref<1x1x8x32xf32, #tpu.memory_space<vmem>>, %arg20: memref<8x32xf32, #tpu.memory_space<vmem>>) attributes {dimension_semantics = [#tpu.dimension_semantics<parallel>, #tpu.dimension_semantics<arbitrary>], iteration_bounds = array<i64: 2, 2>, scalar_prefetch = 0 : i64, scratch_operands = 1 : i64, tpu.core_type = #tpu.core_type<tc>, window_params = [{transform_indices = @transform_0, window_bounds = array<i64: 1, 8, 32>}, {transform_indices = @transform_1, window_bounds = array<i64: 1, 32, 160>}, {transform_indices = @transform_2, window_bounds = array<i64: 1, 1, 160>}, {transform_indices = @transform_3, window_bounds = array<i64: 1, 64, 32>}, {transform_indices = @transform_4, window_bounds = array<i64: 1, 1, 32>}, {transform_indices = @transform_5, window_bounds = array<i64: 1, 4, 8, 32>}, {transform_indices = @transform_6, window_bounds = array<i64: 1, 1, 32>}, {transform_indices = @transform_7, window_bounds = array<i64: 1, 1, 32>}, {transform_indices = @transform_8, window_bounds = array<i64: 1, 1, 32>}, {transform_indices = @transform_9, window_bounds = array<i64: 1, 32, 128>}, {transform_indices = @transform_10, window_bounds = array<i64: 1, 1, 128>}, {transform_indices = @transform_11, window_bounds = array<i64: 1, 64, 32>}, {transform_indices = @transform_12, window_bounds = array<i64: 1, 1, 32>}, {transform_indices = @transform_13, window_bounds = array<i64: 1, 64, 32>}, {transform_indices = @transform_14, window_bounds = array<i64: 1, 1, 32>}, {transform_indices = @transform_15, window_bounds = array<i64: 1, 1, 32>}, {transform_indices = @transform_16, window_bounds = array<i64: 1, 1, 32>}, {transform_indices = @transform_17, window_bounds = array<i64: 1, 1, 8, 32>}]} {
    %c0_i32 = arith.constant 0 : i32
    %0 = arith.cmpi eq, %arg1, %c0_i32 : i32
    %1 = arith.extui %0 : i1 to i32
    %c0_i32_0 = arith.constant 0 : i32
    %2 = arith.cmpi ne, %1, %c0_i32_0 : i32
    scf.if %2 {
      %c0_85 = arith.constant 0 : index
      %c0_86 = arith.constant 0 : index
      %c0_87 = arith.constant 0 : index
      %182 = vector.load %arg2[%c0_85, %c0_86, %c0_87] : memref<1x8x32xf32, #tpu.memory_space<vmem>>, vector<1x8x32xf32>
      %183 = vector.shape_cast %182 : vector<1x8x32xf32> to vector<8x32xf32>
      %c0_88 = arith.constant 0 : index
      %c0_89 = arith.constant 0 : index
      %184 = vector.load %arg20[%c0_88, %c0_89] : memref<8x32xf32, #tpu.memory_space<vmem>>, vector<8x32xf32>
      tpu.vector_store %arg20[%c0_88, %c0_89], %183 {strides = array<i32>} : memref<8x32xf32, #tpu.memory_space<vmem>>, vector<8x32xf32>,
    } else {
    }
    %c0 = arith.constant 0 : index
    %c0_1 = arith.constant 0 : index
    %3 = vector.load %arg20[%c0, %c0_1] : memref<8x32xf32, #tpu.memory_space<vmem>>, vector<8x32xf32>
    %4 = arith.truncf %3 : vector<8x32xf32> to vector<8x32xbf16>
    %c0_2 = arith.constant 0 : index
    %c0_3 = arith.constant 0 : index
    %c0_4 = arith.constant 0 : index
    %5 = vector.load %arg3[%c0_2, %c0_3, %c0_4] : memref<1x32x160xbf16, #tpu.memory_space<vmem>>, vector<1x32x160xbf16>
    %6 = vector.shape_cast %5 : vector<1x32x160xbf16> to vector<32x160xbf16>
    %cst = arith.constant dense<0.000000e+00> : vector<8x160xf32>
    %7 = tpu.matmul %4, %6, %cst {dimension_numbers = #tpu.dot_dimension_numbers<[1], [0], [0], [1], [0, 0, 1, 1], [], []>} : vector<8x32xbf16>, vector<32x160xbf16>, vector<8x160xf32> -> vector<8x160xf32>
    %c0_5 = arith.constant 0 : index
    %c0_6 = arith.constant 0 : index
    %c0_7 = arith.constant 0 : index
    %8 = vector.load %arg4[%c0_5, %c0_6, %c0_7] : memref<1x1x160xf32, #tpu.memory_space<vmem>>, vector<1x1x160xf32>
    %9 = vector.shape_cast %8 : vector<1x1x160xf32> to vector<1x160xf32>
    %10 = vector.broadcast %9 : vector<1x160xf32> to vector<8x160xf32>
    %11 = arith.addf %7, %10 : vector<8x160xf32>
    %12 = vector.extract_strided_slice %11 {offsets = [0, 96], sizes = [8, 64], strides = [1, 1]} : vector<8x160xf32> to vector<8x64xf32>
    %cst_8 = arith.constant 0.000000e+00 : f32
    %13 = vector.broadcast %cst_8 : f32 to vector<8x64xf32>
    %14 = arith.maximumf %12, %13 : vector<8x64xf32>
    %15 = arith.truncf %14 : vector<8x64xf32> to vector<8x64xbf16>
    %c0_9 = arith.constant 0 : index
    %c0_10 = arith.constant 0 : index
    %c0_11 = arith.constant 0 : index
    %16 = vector.load %arg5[%c0_9, %c0_10, %c0_11] : memref<1x64x32xbf16, #tpu.memory_space<vmem>>, vector<1x64x32xbf16>
    %17 = vector.shape_cast %16 : vector<1x64x32xbf16> to vector<64x32xbf16>
    %cst_12 = arith.constant dense<0.000000e+00> : vector<8x32xf32>
    %18 = tpu.matmul %15, %17, %cst_12 {dimension_numbers = #tpu.dot_dimension_numbers<[1], [0], [0], [1], [0, 0, 1, 1], [], []>} : vector<8x64xbf16>, vector<64x32xbf16>, vector<8x32xf32> -> vector<8x32xf32>
    %c0_13 = arith.constant 0 : index
    %c0_14 = arith.constant 0 : index
    %c0_15 = arith.constant 0 : index
    %19 = vector.load %arg6[%c0_13, %c0_14, %c0_15] : memref<1x1x32xf32, #tpu.memory_space<vmem>>, vector<1x1x32xf32>
    %20 = vector.shape_cast %19 : vector<1x1x32xf32> to vector<1x32xf32>
    %21 = vector.broadcast %20 : vector<1x32xf32> to vector<8x32xf32>
    %22 = arith.addf %18, %21 : vector<8x32xf32>
    %23 = vector.extract_strided_slice %11 {offsets = [0, 0], sizes = [8, 32], strides = [1, 1]} : vector<8x160xf32> to vector<8x32xf32>
    %24 = vector.extract_strided_slice %23 {offsets = [0, 0], sizes = [8, 8], strides = [1, 1]} : vector<8x32xf32> to vector<8x8xf32>
    %25 = vector.extract_strided_slice %23 {offsets = [0, 8], sizes = [8, 8], strides = [1, 1]} : vector<8x32xf32> to vector<8x8xf32>
    %26 = vector.extract_strided_slice %23 {offsets = [0, 16], sizes = [8, 8], strides = [1, 1]} : vector<8x32xf32> to vector<8x8xf32>
    %27 = vector.extract_strided_slice %23 {offsets = [0, 24], sizes = [8, 8], strides = [1, 1]} : vector<8x32xf32> to vector<8x8xf32>
    %28 = vector.shape_cast %24 : vector<8x8xf32> to vector<1x8x8xf32>
    %29 = vector.shape_cast %25 : vector<8x8xf32> to vector<1x8x8xf32>
    %30 = vector.shape_cast %26 : vector<8x8xf32> to vector<1x8x8xf32>
    %31 = vector.shape_cast %27 : vector<8x8xf32> to vector<1x8x8xf32>
    %32 = tpu.concatenate %28, %29, %30, %31 in 0 : vector<1x8x8xf32>, vector<1x8x8xf32>, vector<1x8x8xf32>, vector<1x8x8xf32> -> vector<4x8x8xf32>
    %33 = arith.truncf %32 : vector<4x8x8xf32> to vector<4x8x8xbf16>
    %34 = vector.extract_strided_slice %11 {offsets = [0, 32], sizes = [8, 32], strides = [1, 1]} : vector<8x160xf32> to vector<8x32xf32>
    %35 = vector.extract_strided_slice %34 {offsets = [0, 0], sizes = [8, 8], strides = [1, 1]} : vector<8x32xf32> to vector<8x8xf32>
    %36 = vector.extract_strided_slice %34 {offsets = [0, 8], sizes = [8, 8], strides = [1, 1]} : vector<8x32xf32> to vector<8x8xf32>
    %37 = vector.extract_strided_slice %34 {offsets = [0, 16], sizes = [8, 8], strides = [1, 1]} : vector<8x32xf32> to vector<8x8xf32>
    %38 = vector.extract_strided_slice %34 {offsets = [0, 24], sizes = [8, 8], strides = [1, 1]} : vector<8x32xf32> to vector<8x8xf32>
    %39 = vector.shape_cast %35 : vector<8x8xf32> to vector<1x8x8xf32>
    %40 = vector.shape_cast %36 : vector<8x8xf32> to vector<1x8x8xf32>
    %41 = vector.shape_cast %37 : vector<8x8xf32> to vector<1x8x8xf32>
    %42 = vector.shape_cast %38 : vector<8x8xf32> to vector<1x8x8xf32>
    %43 = tpu.concatenate %39, %40, %41, %42 in 0 : vector<1x8x8xf32>, vector<1x8x8xf32>, vector<1x8x8xf32>, vector<1x8x8xf32> -> vector<4x8x8xf32>
    %44 = arith.truncf %43 : vector<4x8x8xf32> to vector<4x8x8xbf16>
    %45 = vector.extract_strided_slice %11 {offsets = [0, 64], sizes = [8, 32], strides = [1, 1]} : vector<8x160xf32> to vector<8x32xf32>
    %46 = vector.extract_strided_slice %45 {offsets = [0, 0], sizes = [8, 8], strides = [1, 1]} : vector<8x32xf32> to vector<8x8xf32>
    %47 = vector.extract_strided_slice %45 {offsets = [0, 8], sizes = [8, 8], strides = [1, 1]} : vector<8x32xf32> to vector<8x8xf32>
    %48 = vector.extract_strided_slice %45 {offsets = [0, 16], sizes = [8, 8], strides = [1, 1]} : vector<8x32xf32> to vector<8x8xf32>
    %49 = vector.extract_strided_slice %45 {offsets = [0, 24], sizes = [8, 8], strides = [1, 1]} : vector<8x32xf32> to vector<8x8xf32>
    %50 = vector.shape_cast %46 : vector<8x8xf32> to vector<1x8x8xf32>
    %51 = vector.shape_cast %47 : vector<8x8xf32> to vector<1x8x8xf32>
    %52 = vector.shape_cast %48 : vector<8x8xf32> to vector<1x8x8xf32>
    %53 = vector.shape_cast %49 : vector<8x8xf32> to vector<1x8x8xf32>
    %54 = tpu.concatenate %50, %51, %52, %53 in 0 : vector<1x8x8xf32>, vector<1x8x8xf32>, vector<1x8x8xf32>, vector<1x8x8xf32> -> vector<4x8x8xf32>
    %55 = arith.truncf %54 : vector<4x8x8xf32> to vector<4x8x8xbf16>
    "tpu.trace_start"() <{level = 10 : i32, message = "hqd,hkd->hqk"}> : () -> ()
    %cst_16 = arith.constant dense<0.000000e+00> : vector<4x8x8xf32>
    %56 = tpu.matmul %33, %44, %cst_16 {dimension_numbers = #tpu.dot_dimension_numbers<[2], [2], [1], [1], [0, 0, 0, 1, 1, 1], [0], [0]>} : vector<4x8x8xbf16>, vector<4x8x8xbf16>, vector<4x8x8xf32> -> vector<4x8x8xf32>
    "tpu.trace_stop"() : () -> ()
    %cst_17 = arith.constant dense<0xFF800000> : vector<4x8xf32>
    %57 = vector.multi_reduction <maximumf>, %56, %cst_17 [2] : vector<4x8x8xf32> to vector<4x8xf32>
    %58 = vector.shape_cast %57 : vector<4x8xf32> to vector<4x8x1xf32>
    %59 = vector.broadcast %58 : vector<4x8x1xf32> to vector<4x8x8xf32>
    %60 = arith.subf %56, %59 : vector<4x8x8xf32>
    %61 = math.exp %60 : vector<4x8x8xf32>
    %cst_18 = arith.constant dense<0.000000e+00> : vector<4x8xf32>
    %62 = vector.multi_reduction <add>, %61, %cst_18 [2] : vector<4x8x8xf32> to vector<4x8xf32>
    %63 = vector.shape_cast %62 : vector<4x8xf32> to vector<4x8x1xf32>
    %64 = tpu.reciprocal %63 {approx = true} : vector<4x8x1xf32> -> vector<4x8x1xf32>
    %65 = vector.broadcast %64 : vector<4x8x1xf32> to vector<4x8x8xf32>
    %66 = arith.mulf %61, %65 : vector<4x8x8xf32>
    %67 = arith.truncf %66 : vector<4x8x8xf32> to vector<4x8x8xbf16>
    "tpu.trace_start"() <{level = 10 : i32, message = "hqk,hkd->hqd"}> : () -> ()
    %cst_19 = arith.constant dense<0.000000e+00> : vector<4x8x8xf32>
    %68 = tpu.matmul %67, %55, %cst_19 {dimension_numbers = #tpu.dot_dimension_numbers<[2], [1], [1], [2], [0, 0, 0, 1, 1, 2], [0], [0]>} : vector<4x8x8xbf16>, vector<4x8x8xbf16>, vector<4x8x8xf32> -> vector<4x8x8xf32>
    "tpu.trace_stop"() : () -> ()
    %69 = arith.truncf %68 : vector<4x8x8xf32> to vector<4x8x8xbf16>
    %c0_20 = arith.constant 0 : index
    %c0_21 = arith.constant 0 : index
    %c0_22 = arith.constant 0 : index
    %c0_23 = arith.constant 0 : index
    %70 = vector.load %arg7[%c0_20, %c0_21, %c0_22, %c0_23] : memref<1x4x8x32xbf16, #tpu.memory_space<vmem>>, vector<1x4x8x32xbf16>
    %71 = vector.shape_cast %70 : vector<1x4x8x32xbf16> to vector<4x8x32xbf16>
    "tpu.trace_start"() <{level = 10 : i32, message = "hqd,hdk->hqk"}> : () -> ()
    %cst_24 = arith.constant dense<0.000000e+00> : vector<4x8x32xf32>
    %72 = tpu.matmul %69, %71, %cst_24 {dimension_numbers = #tpu.dot_dimension_numbers<[2], [1], [1], [2], [0, 0, 0, 1, 1, 2], [0], [0]>} : vector<4x8x8xbf16>, vector<4x8x32xbf16>, vector<4x8x32xf32> -> vector<4x8x32xf32>
    "tpu.trace_stop"() : () -> ()
    %cst_25 = arith.constant dense<0.000000e+00> : vector<8x32xf32>
    %73 = vector.multi_reduction <add>, %72, %cst_25 [0] : vector<4x8x32xf32> to vector<8x32xf32>
    %c0_26 = arith.constant 0 : index
    %c0_27 = arith.constant 0 : index
    %c0_28 = arith.constant 0 : index
    %74 = vector.load %arg8[%c0_26, %c0_27, %c0_28] : memref<1x1x32xf32, #tpu.memory_space<vmem>>, vector<1x1x32xf32>
    %75 = vector.shape_cast %74 : vector<1x1x32xf32> to vector<1x32xf32>
    %76 = vector.broadcast %75 : vector<1x32xf32> to vector<8x32xf32>
    %77 = arith.addf %73, %76 : vector<8x32xf32>
    %c0_29 = arith.constant 0 : index
    %c0_30 = arith.constant 0 : index
    %c0_31 = arith.constant 0 : index
    %78 = vector.load %arg9[%c0_29, %c0_30, %c0_31] : memref<1x1x32xf32, #tpu.memory_space<vmem>>, vector<1x1x32xf32>
    %79 = vector.shape_cast %78 : vector<1x1x32xf32> to vector<1x32xf32>
    %c0_32 = arith.constant 0 : index
    %c0_33 = arith.constant 0 : index
    %c0_34 = arith.constant 0 : index
    %80 = vector.load %arg10[%c0_32, %c0_33, %c0_34] : memref<1x1x32xf32, #tpu.memory_space<vmem>>, vector<1x1x32xf32>
    %81 = vector.shape_cast %80 : vector<1x1x32xf32> to vector<1x32xf32>
    %82 = arith.negf %22 : vector<8x32xf32>
    %83 = math.exp %82 : vector<8x32xf32>
    %cst_35 = arith.constant 1.000000e+00 : f32
    %84 = vector.broadcast %cst_35 : f32 to vector<8x32xf32>
    %85 = arith.addf %84, %83 : vector<8x32xf32>
    %86 = arith.divf %84, %85 : vector<8x32xf32>
    %87 = arith.mulf %3, %86 : vector<8x32xf32>
    %cst_36 = arith.constant 1.000000e+00 : f32
    %88 = vector.broadcast %cst_36 : f32 to vector<8x32xf32>
    %89 = arith.subf %88, %86 : vector<8x32xf32>
    %90 = arith.mulf %77, %89 : vector<8x32xf32>
    %91 = arith.addf %87, %90 : vector<8x32xf32>
    %cst_37 = arith.constant dense<0.000000e+00> : vector<8xf32>
    %92 = vector.multi_reduction <add>, %91, %cst_37 [1] : vector<8x32xf32> to vector<8xf32>
    %93 = vector.shape_cast %92 : vector<8xf32> to vector<8x1xf32>
    %cst_38 = arith.constant 3.200000e+01 : f32
    %94 = vector.broadcast %cst_38 : f32 to vector<8x1xf32>
    %95 = arith.divf %93, %94 : vector<8x1xf32>
    %96 = vector.broadcast %95 : vector<8x1xf32> to vector<8x32xf32>
    %97 = arith.subf %91, %96 : vector<8x32xf32>
    %98 = arith.mulf %97, %97 : vector<8x32xf32>
    %cst_39 = arith.constant dense<0.000000e+00> : vector<8xf32>
    %99 = vector.multi_reduction <add>, %98, %cst_39 [1] : vector<8x32xf32> to vector<8xf32>
    %100 = vector.shape_cast %99 : vector<8xf32> to vector<8x1xf32>
    %cst_40 = arith.constant 0.0322580636 : f32
    %101 = vector.broadcast %cst_40 : f32 to vector<8x1xf32>
    %102 = arith.mulf %100, %101 : vector<8x1xf32>
    %103 = math.sqrt %102 : vector<8x1xf32>
    %cst_41 = arith.constant 9.99999997E-7 : f32
    %104 = vector.broadcast %cst_41 : f32 to vector<8x1xf32>
    %105 = arith.addf %103, %104 : vector<8x1xf32>
    %cst_42 = arith.constant 1.000000e+00 : f32
    %106 = vector.broadcast %cst_42 : f32 to vector<8x1xf32>
    %107 = arith.divf %106, %105 : vector<8x1xf32>
    %108 = vector.broadcast %107 : vector<8x1xf32> to vector<8x32xf32>
    %109 = arith.mulf %97, %108 : vector<8x32xf32>
    %110 = vector.broadcast %79 : vector<1x32xf32> to vector<8x32xf32>
    %111 = arith.mulf %110, %109 : vector<8x32xf32>
    %112 = vector.broadcast %81 : vector<1x32xf32> to vector<8x32xf32>
    %113 = arith.addf %111, %112 : vector<8x32xf32>
    %114 = arith.truncf %113 : vector<8x32xf32> to vector<8x32xbf16>
    %c0_43 = arith.constant 0 : index
    %c0_44 = arith.constant 0 : index
    %c0_45 = arith.constant 0 : index
    %115 = vector.load %arg11[%c0_43, %c0_44, %c0_45] : memref<1x32x128xbf16, #tpu.memory_space<vmem>>, vector<1x32x128xbf16>
    %116 = vector.shape_cast %115 : vector<1x32x128xbf16> to vector<32x128xbf16>
    %cst_46 = arith.constant dense<0.000000e+00> : vector<8x128xf32>
    %117 = tpu.matmul %114, %116, %cst_46 {dimension_numbers = #tpu.dot_dimension_numbers<[1], [0], [0], [1], [0, 0, 1, 1], [], []>} : vector<8x32xbf16>, vector<32x128xbf16>, vector<8x128xf32> -> vector<8x128xf32>
    %c0_47 = arith.constant 0 : index
    %c0_48 = arith.constant 0 : index
    %c0_49 = arith.constant 0 : index
    %118 = vector.load %arg12[%c0_47, %c0_48, %c0_49] : memref<1x1x128xf32, #tpu.memory_space<vmem>>, vector<1x1x128xf32>
    %119 = vector.shape_cast %118 : vector<1x1x128xf32> to vector<1x128xf32>
    %120 = vector.broadcast %119 : vector<1x128xf32> to vector<8x128xf32>
    %121 = arith.addf %117, %120 : vector<8x128xf32>
    %cst_50 = arith.constant 0.000000e+00 : f32
    %122 = vector.broadcast %cst_50 : f32 to vector<8x128xf32>
    %123 = arith.maximumf %121, %122 : vector<8x128xf32>
    %124 = vector.extract_strided_slice %123 {offsets = [0, 0], sizes = [8, 64], strides = [1, 1]} : vector<8x128xf32> to vector<8x64xf32>
    %125 = arith.truncf %124 : vector<8x64xf32> to vector<8x64xbf16>
    %c0_51 = arith.constant 0 : index
    %c0_52 = arith.constant 0 : index
    %c0_53 = arith.constant 0 : index
    %126 = vector.load %arg13[%c0_51, %c0_52, %c0_53] : memref<1x64x32xbf16, #tpu.memory_space<vmem>>, vector<1x64x32xbf16>
    %127 = vector.shape_cast %126 : vector<1x64x32xbf16> to vector<64x32xbf16>
    %cst_54 = arith.constant dense<0.000000e+00> : vector<8x32xf32>
    %128 = tpu.matmul %125, %127, %cst_54 {dimension_numbers = #tpu.dot_dimension_numbers<[1], [0], [0], [1], [0, 0, 1, 1], [], []>} : vector<8x64xbf16>, vector<64x32xbf16>, vector<8x32xf32> -> vector<8x32xf32>
    %c0_55 = arith.constant 0 : index
    %c0_56 = arith.constant 0 : index
    %c0_57 = arith.constant 0 : index
    %129 = vector.load %arg14[%c0_55, %c0_56, %c0_57] : memref<1x1x32xf32, #tpu.memory_space<vmem>>, vector<1x1x32xf32>
    %130 = vector.shape_cast %129 : vector<1x1x32xf32> to vector<1x32xf32>
    %131 = vector.broadcast %130 : vector<1x32xf32> to vector<8x32xf32>
    %132 = arith.addf %128, %131 : vector<8x32xf32>
    %133 = vector.extract_strided_slice %123 {offsets = [0, 64], sizes = [8, 64], strides = [1, 1]} : vector<8x128xf32> to vector<8x64xf32>
    %134 = arith.truncf %133 : vector<8x64xf32> to vector<8x64xbf16>
    %c0_58 = arith.constant 0 : index
    %c0_59 = arith.constant 0 : index
    %c0_60 = arith.constant 0 : index
    %135 = vector.load %arg15[%c0_58, %c0_59, %c0_60] : memref<1x64x32xbf16, #tpu.memory_space<vmem>>, vector<1x64x32xbf16>
    %136 = vector.shape_cast %135 : vector<1x64x32xbf16> to vector<64x32xbf16>
    %cst_61 = arith.constant dense<0.000000e+00> : vector<8x32xf32>
    %137 = tpu.matmul %134, %136, %cst_61 {dimension_numbers = #tpu.dot_dimension_numbers<[1], [0], [0], [1], [0, 0, 1, 1], [], []>} : vector<8x64xbf16>, vector<64x32xbf16>, vector<8x32xf32> -> vector<8x32xf32>
    %c0_62 = arith.constant 0 : index
    %c0_63 = arith.constant 0 : index
    %c0_64 = arith.constant 0 : index
    %138 = vector.load %arg16[%c0_62, %c0_63, %c0_64] : memref<1x1x32xf32, #tpu.memory_space<vmem>>, vector<1x1x32xf32>
    %139 = vector.shape_cast %138 : vector<1x1x32xf32> to vector<1x32xf32>
    %140 = vector.broadcast %139 : vector<1x32xf32> to vector<8x32xf32>
    %141 = arith.addf %137, %140 : vector<8x32xf32>
    %c0_65 = arith.constant 0 : index
    %c0_66 = arith.constant 0 : index
    %c0_67 = arith.constant 0 : index
    %142 = vector.load %arg17[%c0_65, %c0_66, %c0_67] : memref<1x1x32xf32, #tpu.memory_space<vmem>>, vector<1x1x32xf32>
    %143 = vector.shape_cast %142 : vector<1x1x32xf32> to vector<1x32xf32>
    %c0_68 = arith.constant 0 : index
    %c0_69 = arith.constant 0 : index
    %c0_70 = arith.constant 0 : index
    %144 = vector.load %arg18[%c0_68, %c0_69, %c0_70] : memref<1x1x32xf32, #tpu.memory_space<vmem>>, vector<1x1x32xf32>
    %145 = vector.shape_cast %144 : vector<1x1x32xf32> to vector<1x32xf32>
    %146 = arith.negf %132 : vector<8x32xf32>
    %147 = math.exp %146 : vector<8x32xf32>
    %cst_71 = arith.constant 1.000000e+00 : f32
    %148 = vector.broadcast %cst_71 : f32 to vector<8x32xf32>
    %149 = arith.addf %148, %147 : vector<8x32xf32>
    %150 = arith.divf %148, %149 : vector<8x32xf32>
    %151 = arith.mulf %113, %150 : vector<8x32xf32>
    %cst_72 = arith.constant 1.000000e+00 : f32
    %152 = vector.broadcast %cst_72 : f32 to vector<8x32xf32>
    %153 = arith.subf %152, %150 : vector<8x32xf32>
    %154 = arith.mulf %141, %153 : vector<8x32xf32>
    %155 = arith.addf %151, %154 : vector<8x32xf32>
    %cst_73 = arith.constant dense<0.000000e+00> : vector<8xf32>
    %156 = vector.multi_reduction <add>, %155, %cst_73 [1] : vector<8x32xf32> to vector<8xf32>
    %157 = vector.shape_cast %156 : vector<8xf32> to vector<8x1xf32>
    %cst_74 = arith.constant 3.200000e+01 : f32
    %158 = vector.broadcast %cst_74 : f32 to vector<8x1xf32>
    %159 = arith.divf %157, %158 : vector<8x1xf32>
    %160 = vector.broadcast %159 : vector<8x1xf32> to vector<8x32xf32>
    %161 = arith.subf %155, %160 : vector<8x32xf32>
    %162 = arith.mulf %161, %161 : vector<8x32xf32>
    %cst_75 = arith.constant dense<0.000000e+00> : vector<8xf32>
    %163 = vector.multi_reduction <add>, %162, %cst_75 [1] : vector<8x32xf32> to vector<8xf32>
    %164 = vector.shape_cast %163 : vector<8xf32> to vector<8x1xf32>
    %cst_76 = arith.constant 0.0322580636 : f32
    %165 = vector.broadcast %cst_76 : f32 to vector<8x1xf32>
    %166 = arith.mulf %164, %165 : vector<8x1xf32>
    %167 = math.sqrt %166 : vector<8x1xf32>
    %cst_77 = arith.constant 9.99999997E-7 : f32
    %168 = vector.broadcast %cst_77 : f32 to vector<8x1xf32>
    %169 = arith.addf %167, %168 : vector<8x1xf32>
    %cst_78 = arith.constant 1.000000e+00 : f32
    %170 = vector.broadcast %cst_78 : f32 to vector<8x1xf32>
    %171 = arith.divf %170, %169 : vector<8x1xf32>
    %172 = vector.broadcast %171 : vector<8x1xf32> to vector<8x32xf32>
    %173 = arith.mulf %161, %172 : vector<8x32xf32>
    %174 = vector.broadcast %143 : vector<1x32xf32> to vector<8x32xf32>
    %175 = arith.mulf %174, %173 : vector<8x32xf32>
    %176 = vector.broadcast %145 : vector<1x32xf32> to vector<8x32xf32>
    %177 = arith.addf %175, %176 : vector<8x32xf32>
    %c0_79 = arith.constant 0 : index
    %c0_80 = arith.constant 0 : index
    %178 = vector.load %arg20[%c0_79, %c0_80] : memref<8x32xf32, #tpu.memory_space<vmem>>, vector<8x32xf32>
    tpu.vector_store %arg20[%c0_79, %c0_80], %177 {strides = array<i32>} : memref<8x32xf32, #tpu.memory_space<vmem>>, vector<8x32xf32>,
    %c0_81 = arith.constant 0 : index
    %c0_82 = arith.constant 0 : index
    %c0_83 = arith.constant 0 : index
    %c0_84 = arith.constant 0 : index
    %179 = vector.load %arg19[%c0_81, %c0_82, %c0_83, %c0_84] : memref<1x1x8x32xf32, #tpu.memory_space<vmem>>, vector<1x1x8x32xf32>
    %180 = vector.shape_cast %179 : vector<1x1x8x32xf32> to vector<8x32xf32>
    %181 = vector.shape_cast %177 : vector<8x32xf32> to vector<1x1x8x32xf32>
    tpu.vector_store %arg19[%c0_81, %c0_82, %c0_83, %c0_84], %181 {strides = array<i32>} : memref<1x1x8x32xf32, #tpu.memory_space<vmem>>, vector<1x1x8x32xf32>,
    return
  }
  func.func @transform_0(%arg0: i32, %arg1: i32) -> (i32, i32, i32) {
    %c0_i32 = arith.constant 0 : i32
    %c0_i32_0 = arith.constant 0 : i32
    %c0_i32_1 = arith.constant 0 : i32
    return %arg0, %c0_i32, %c0_i32_0 : i32, i32, i32
  }
  func.func @transform_1(%arg0: i32, %arg1: i32) -> (i32, i32, i32) {
    %c0_i32 = arith.constant 0 : i32
    %c0_i32_0 = arith.constant 0 : i32
    %c0_i32_1 = arith.constant 0 : i32
    return %arg1, %c0_i32, %c0_i32_0 : i32, i32, i32
  }
  func.func @transform_2(%arg0: i32, %arg1: i32) -> (i32, i32, i32) {
    %c0_i32 = arith.constant 0 : i32
    %c0_i32_0 = arith.constant 0 : i32
    %c0_i32_1 = arith.constant 0 : i32
    return %arg1, %c0_i32, %c0_i32_0 : i32, i32, i32
  }
  func.func @transform_3(%arg0: i32, %arg1: i32) -> (i32, i32, i32) {
    %c0_i32 = arith.constant 0 : i32
    %c0_i32_0 = arith.constant 0 : i32
    %c0_i32_1 = arith.constant 0 : i32
    return %arg1, %c0_i32, %c0_i32_0 : i32, i32, i32
  }
  func.func @transform_4(%arg0: i32, %arg1: i32) -> (i32, i32, i32) {
    %c0_i32 = arith.constant 0 : i32
    %c0_i32_0 = arith.constant 0 : i32
    %c0_i32_1 = arith.constant 0 : i32
    return %arg1, %c0_i32, %c0_i32_0 : i32, i32, i32
  }
  func.func @transform_5(%arg0: i32, %arg1: i32) -> (i32, i32, i32, i32) {
    %c0_i32 = arith.constant 0 : i32
    %c0_i32_0 = arith.constant 0 : i32
    %c0_i32_1 = arith.constant 0 : i32
    %c0_i32_2 = arith.constant 0 : i32
    return %arg1, %c0_i32, %c0_i32_0, %c0_i32_1 : i32, i32, i32, i32
  }
  func.func @transform_6(%arg0: i32, %arg1: i32) -> (i32, i32, i32) {
    %c0_i32 = arith.constant 0 : i32
    %c0_i32_0 = arith.constant 0 : i32
    %c0_i32_1 = arith.constant 0 : i32
    return %arg1, %c0_i32, %c0_i32_0 : i32, i32, i32
  }
  func.func @transform_7(%arg0: i32, %arg1: i32) -> (i32, i32, i32) {
    %c0_i32 = arith.constant 0 : i32
    %c0_i32_0 = arith.constant 0 : i32
    %c0_i32_1 = arith.constant 0 : i32
    return %arg1, %c0_i32, %c0_i32_0 : i32, i32, i32
  }
  func.func @transform_8(%arg0: i32, %arg1: i32) -> (i32, i32, i32) {
    %c0_i32 = arith.constant 0 : i32
    %c0_i32_0 = arith.constant 0 : i32
    %c0_i32_1 = arith.constant 0 : i32
    return %arg1, %c0_i32, %c0_i32_0 : i32, i32, i32
  }
  func.func @transform_9(%arg0: i32, %arg1: i32) -> (i32, i32, i32) {
    %c0_i32 = arith.constant 0 : i32
    %c0_i32_0 = arith.constant 0 : i32
    %c0_i32_1 = arith.constant 0 : i32
    return %arg1, %c0_i32, %c0_i32_0 : i32, i32, i32
  }
  func.func @transform_10(%arg0: i32, %arg1: i32) -> (i32, i32, i32) {
    %c0_i32 = arith.constant 0 : i32
    %c0_i32_0 = arith.constant 0 : i32
    %c0_i32_1 = arith.constant 0 : i32
    return %arg1, %c0_i32, %c0_i32_0 : i32, i32, i32
  }
  func.func @transform_11(%arg0: i32, %arg1: i32) -> (i32, i32, i32) {
    %c0_i32 = arith.constant 0 : i32
    %c0_i32_0 = arith.constant 0 : i32
    %c0_i32_1 = arith.constant 0 : i32
    return %arg1, %c0_i32, %c0_i32_0 : i32, i32, i32
  }
  func.func @transform_12(%arg0: i32, %arg1: i32) -> (i32, i32, i32) {
    %c0_i32 = arith.constant 0 : i32
    %c0_i32_0 = arith.constant 0 : i32
    %c0_i32_1 = arith.constant 0 : i32
    return %arg1, %c0_i32, %c0_i32_0 : i32, i32, i32
  }
  func.func @transform_13(%arg0: i32, %arg1: i32) -> (i32, i32, i32) {
    %c0_i32 = arith.constant 0 : i32
    %c0_i32_0 = arith.constant 0 : i32
    %c0_i32_1 = arith.constant 0 : i32
    return %arg1, %c0_i32, %c0_i32_0 : i32, i32, i32
  }
  func.func @transform_14(%arg0: i32, %arg1: i32) -> (i32, i32, i32) {
    %c0_i32 = arith.constant 0 : i32
    %c0_i32_0 = arith.constant 0 : i32
    %c0_i32_1 = arith.constant 0 : i32
    return %arg1, %c0_i32, %c0_i32_0 : i32, i32, i32
  }
  func.func @transform_15(%arg0: i32, %arg1: i32) -> (i32, i32, i32) {
    %c0_i32 = arith.constant 0 : i32
    %c0_i32_0 = arith.constant 0 : i32
    %c0_i32_1 = arith.constant 0 : i32
    return %arg1, %c0_i32, %c0_i32_0 : i32, i32, i32
  }
  func.func @transform_16(%arg0: i32, %arg1: i32) -> (i32, i32, i32) {
    %c0_i32 = arith.constant 0 : i32
    %c0_i32_0 = arith.constant 0 : i32
    %c0_i32_1 = arith.constant 0 : i32
    return %arg1, %c0_i32, %c0_i32_0 : i32, i32, i32
  }
  func.func @transform_17(%arg0: i32, %arg1: i32) -> (i32, i32, i32, i32) {
    %c0_i32 = arith.constant 0 : i32
    %c0_i32_0 = arith.constant 0 : i32
    %c0_i32_1 = arith.constant 0 : i32
    return %arg1, %arg0, %c0_i32, %c0_i32_0 : i32, i32, i32, i32
  }
}

</mosaic_0001>

<llo_original>
// kernel: encoder_forward.1
$region0: #{encoder_forward.1}
  #allocation0 [shape = 'u32[]', space=smem, size = 0x4, offset = 0x4, fixed_abs, tag = 'smem constant byte address 0x4 - core index']
  #allocation1 [shape = 'u32[144,128]{1,0:T(1,128)}', space=vmem, size = 0x12000, scoped, tag = 'internal scratch']
  #allocation2 [shape = 'f32[8,32]{1,0:T(8,128)}', space=vmem, size = 0x1000, scoped, tag = 'scratch operand']
  %s0 = inlined_call_operand.vmem [shape: f32[2,8,32], index: 0, kind: input, shape index: {}]
  %s1 = inlined_call_operand.vmem [shape: bf16[2,32,160], index: 1, kind: input, shape index: {}]
  %s2 = inlined_call_operand.vmem [shape: f32[2,1,160], index: 2, kind: input, shape index: {}]
  %s3 = inlined_call_operand.vmem [shape: bf16[2,64,32], index: 3, kind: input, shape index: {}]
  %s4 = inlined_call_operand.vmem [shape: f32[2,1,32], index: 4, kind: input, shape index: {}]
  %s5 = inlined_call_operand.vmem [shape: bf16[2,4,8,32], index: 5, kind: input, shape index: {}]
  %s6 = inlined_call_operand.vmem [shape: f32[2,1,32], index: 6, kind: input, shape index: {}]
  %s7 = inlined_call_operand.vmem [shape: f32[2,1,32], index: 7, kind: input, shape index: {}]
  %s8 = inlined_call_operand.vmem [shape: f32[2,1,32], index: 8, kind: input, shape index: {}]
  %s9 = inlined_call_operand.vmem [shape: bf16[2,32,128], index: 9, kind: input, shape index: {}]
  %s10 = inlined_call_operand.vmem [shape: f32[2,1,128], index: 10, kind: input, shape index: {}]
  %s11 = inlined_call_operand.vmem [shape: bf16[2,64,32], index: 11, kind: input, shape index: {}]
  %s12 = inlined_call_operand.vmem [shape: f32[2,1,32], index: 12, kind: input, shape index: {}]
  %s13 = inlined_call_operand.vmem [shape: bf16[2,64,32], index: 13, kind: input, shape index: {}]
  %s14 = inlined_call_operand.vmem [shape: f32[2,1,32], index: 14, kind: input, shape index: {}]
  %s15 = inlined_call_operand.vmem [shape: f32[2,1,32], index: 15, kind: input, shape index: {}]
  %s16 = inlined_call_operand.vmem [shape: f32[2,1,32], index: 16, kind: input, shape index: {}]
  %s17 = inlined_call_operand.vmem [shape: f32[2,2,8,32], index: 17, kind: output, shape index: {}]
  %s18 = sld [smem:[#allocation0]]
  $region105: #{encoder_forward.1} parent=0
    _
  %s20 = ssub.s32 1, %s18
  %s21 = scalar_select 0, %s20, %s18
  loop: start=0, step=1, limit=6
  $region2: #{encoder_forward.1} parent=0 // loop_pre_header
    _
  $region3: #{encoder_forward.1} parent=0 // loop_header
    %s23 = sphi 0, %s27
    %p24 = scmp.ge.s32.totalorder %s23, 6
    %s30 = sphi 0, %s42
    %s31 = sphi 0, %s38
    %s32 = sphi 0, %s30
    %s33 = sphi 0, %s31
    %s34 = sphi 0, %s32
    %s35 = sphi 0, %s33
    %s45 = sphi 0, %s47
    %s48 = sphi 0, %s45
    %s49 = sphi 0, %s48
    %s65 = sphi 0, %s49
    %s71 = sphi 0, %s73
    %s74 = sphi 0, %s71
    %s75 = sphi 0, %s74
    %s91 = sphi 0, %s75
    %s97 = sphi 0, %s99
    %s100 = sphi 0, %s97
    %s101 = sphi 0, %s100
    %s117 = sphi 0, %s101
    %s123 = sphi 0, %s125
    %s126 = sphi 0, %s123
    %s127 = sphi 0, %s126
    %s143 = sphi 0, %s127
    %s149 = sphi 0, %s151
    %s152 = sphi 0, %s149
    %s153 = sphi 0, %s152
    %s169 = sphi 0, %s153
    %s175 = sphi 0, %s177
    %s178 = sphi 0, %s175
    %s179 = sphi 0, %s178
    %s195 = sphi 0, %s179
    %s201 = sphi 0, %s203
    %s204 = sphi 0, %s201
    %s205 = sphi 0, %s204
    %s221 = sphi 0, %s205
    %s227 = sphi 0, %s229
    %s230 = sphi 0, %s227
    %s231 = sphi 0, %s230
    %s247 = sphi 0, %s231
    %s253 = sphi 0, %s255
    %s256 = sphi 0, %s253
    %s257 = sphi 0, %s256
    %s273 = sphi 0, %s257
    %s279 = sphi 0, %s281
    %s282 = sphi 0, %s279
    %s283 = sphi 0, %s282
    %s299 = sphi 0, %s283
    %s305 = sphi 0, %s307
    %s308 = sphi 0, %s305
    %s309 = sphi 0, %s308
    %s325 = sphi 0, %s309
    %s331 = sphi 0, %s333
    %s334 = sphi 0, %s331
    %s335 = sphi 0, %s334
    %s351 = sphi 0, %s335
    %s357 = sphi 0, %s359
    %s360 = sphi 0, %s357
    %s361 = sphi 0, %s360
    %s377 = sphi 0, %s361
    %s383 = sphi 0, %s385
    %s386 = sphi 0, %s383
    %s387 = sphi 0, %s386
    %s403 = sphi 0, %s387
    %s409 = sphi 0, %s411
    %s412 = sphi 0, %s409
    %s413 = sphi 0, %s412
    %s429 = sphi 0, %s413
    %s435 = sphi 0, %s437
    %s438 = sphi 0, %s435
    %s439 = sphi 0, %s438
    %s455 = sphi 0, %s439
    %s461 = sphi 0, %s463
    %s464 = sphi 0, %s461
    %s465 = sphi 0, %s464
    %s481 = sphi 0, %s465
    %s489 = sphi 0, %s491
    %s492 = sphi 0, %s489
    %s493 = sphi 0, %s492
    %s509 = sphi 0, %s493
  $region4: #{encoder_forward.1} parent=0 // loop_header_branch
    %26 = sbr.rel (%p24) target = $region8
  $region5: #{encoder_forward.1} parent=0 // loop_body
    %s28 = ssub.s32 %s23, 1
    %s29 = ssub.s32 %s23, 2
    %s36 = sadd.s32 1, %s31
    %p37 = scmp.ge.s32.totalorder %s36, 2
    %s38 = scalar_select %p37, 0, %s36
    %s39 = sadd.s32 1, %s30
    %s40 = scalar_select %p37, %s39, %s30
    %p41 = scmp.ge.s32.totalorder %s40, 2
    %s42 = scalar_select %p41, 0, %s40
    %s43 = ssub.s32 %s30, %s42
    %p44 = scmp.eq.s32.totalorder %s43, 0
    %s46 = sadd.s32 %s45, 1
    %s47 = scalar_select %p44, %s45, %s46
    %p50 = pneg %p44
    %p51 = scmp.eq.s32.totalorder %s23, 3
    %p52 = por %p50, %p51
    %p53 = scmp.ne.s32.totalorder %s45, %s48
    %p54 = scmp.eq.s32.totalorder %s23, 0
    %p55 = por %p53, %p54
    %p56 = scmp.ne.s32.totalorder %s45, %s48
    %p57 = scmp.eq.s32.totalorder %s28, 3
    %p58 = por %p56, %p57
    %p59 = scmp.ne.s32.totalorder %s48, %s49
    %p60 = scmp.eq.s32.totalorder %s28, 0
    %p61 = por %p59, %p60
    %p62 = scmp.ne.s32.totalorder %s48, %s49
    %p63 = scmp.eq.s32.totalorder %s29, 3
    %p64 = por %p62, %p63
    %p66 = scmp.ne.s32.totalorder %s49, %s65
    %p67 = scmp.eq.s32.totalorder %s29, 0
    %p68 = por %p66, %p67
    %s69 = ssub.s32 %s31, %s38
    %p70 = scmp.eq.s32.totalorder %s69, 0
    %s72 = sadd.s32 %s71, 1
    %s73 = scalar_select %p70, %s71, %s72
    %p76 = pneg %p70
    %p77 = scmp.eq.s32.totalorder %s23, 3
    %p78 = por %p76, %p77
    %p79 = scmp.ne.s32.totalorder %s71, %s74
    %p80 = scmp.eq.s32.totalorder %s23, 0
    %p81 = por %p79, %p80
    %p82 = scmp.ne.s32.totalorder %s71, %s74
    %p83 = scmp.eq.s32.totalorder %s28, 3
    %p84 = por %p82, %p83
    %p85 = scmp.ne.s32.totalorder %s74, %s75
    %p86 = scmp.eq.s32.totalorder %s28, 0
    %p87 = por %p85, %p86
    %p88 = scmp.ne.s32.totalorder %s74, %s75
    %p89 = scmp.eq.s32.totalorder %s29, 3
    %p90 = por %p88, %p89
    %p92 = scmp.ne.s32.totalorder %s75, %s91
    %p93 = scmp.eq.s32.totalorder %s29, 0
    %p94 = por %p92, %p93
    %s95 = ssub.s32 %s31, %s38
    %p96 = scmp.eq.s32.totalorder %s95, 0
    %s98 = sadd.s32 %s97, 1
    %s99 = scalar_select %p96, %s97, %s98
    %p102 = pneg %p96
    %p103 = scmp.eq.s32.totalorder %s23, 3
    %p104 = por %p102, %p103
    %p105 = scmp.ne.s32.totalorder %s97, %s100
    %p106 = scmp.eq.s32.totalorder %s23, 0
    %p107 = por %p105, %p106
    %p108 = scmp.ne.s32.totalorder %s97, %s100
    %p109 = scmp.eq.s32.totalorder %s28, 3
    %p110 = por %p108, %p109
    %p111 = scmp.ne.s32.totalorder %s100, %s101
    %p112 = scmp.eq.s32.totalorder %s28, 0
    %p113 = por %p111, %p112
    %p114 = scmp.ne.s32.totalorder %s100, %s101
    %p115 = scmp.eq.s32.totalorder %s29, 3
    %p116 = por %p114, %p115
    %p118 = scmp.ne.s32.totalorder %s101, %s117
    %p119 = scmp.eq.s32.totalorder %s29, 0
    %p120 = por %p118, %p119
    %s121 = ssub.s32 %s31, %s38
    %p122 = scmp.eq.s32.totalorder %s121, 0
    %s124 = sadd.s32 %s123, 1
    %s125 = scalar_select %p122, %s123, %s124
    %p128 = pneg %p122
    %p129 = scmp.eq.s32.totalorder %s23, 3
    %p130 = por %p128, %p129
    %p131 = scmp.ne.s32.totalorder %s123, %s126
    %p132 = scmp.eq.s32.totalorder %s23, 0
    %p133 = por %p131, %p132
    %p134 = scmp.ne.s32.totalorder %s123, %s126
    %p135 = scmp.eq.s32.totalorder %s28, 3
    %p136 = por %p134, %p135
    %p137 = scmp.ne.s32.totalorder %s126, %s127
    %p138 = scmp.eq.s32.totalorder %s28, 0
    %p139 = por %p137, %p138
    %p140 = scmp.ne.s32.totalorder %s126, %s127
    %p141 = scmp.eq.s32.totalorder %s29, 3
    %p142 = por %p140, %p141
    %p144 = scmp.ne.s32.totalorder %s127, %s143
    %p145 = scmp.eq.s32.totalorder %s29, 0
    %p146 = por %p144, %p145
    %s147 = ssub.s32 %s31, %s38
    %p148 = scmp.eq.s32.totalorder %s147, 0
    %s150 = sadd.s32 %s149, 1
    %s151 = scalar_select %p148, %s149, %s150
    %p154 = pneg %p148
    %p155 = scmp.eq.s32.totalorder %s23, 3
    %p156 = por %p154, %p155
    %p157 = scmp.ne.s32.totalorder %s149, %s152
    %p158 = scmp.eq.s32.totalorder %s23, 0
    %p159 = por %p157, %p158
    %p160 = scmp.ne.s32.totalorder %s149, %s152
    %p161 = scmp.eq.s32.totalorder %s28, 3
    %p162 = por %p160, %p161
    %p163 = scmp.ne.s32.totalorder %s152, %s153
    %p164 = scmp.eq.s32.totalorder %s28, 0
    %p165 = por %p163, %p164
    %p166 = scmp.ne.s32.totalorder %s152, %s153
    %p167 = scmp.eq.s32.totalorder %s29, 3
    %p168 = por %p166, %p167
    %p170 = scmp.ne.s32.totalorder %s153, %s169
    %p171 = scmp.eq.s32.totalorder %s29, 0
    %p172 = por %p170, %p171
    %s173 = ssub.s32 %s31, %s38
    %p174 = scmp.eq.s32.totalorder %s173, 0
    %s176 = sadd.s32 %s175, 1
    %s177 = scalar_select %p174, %s175, %s176
    %p180 = pneg %p174
    %p181 = scmp.eq.s32.totalorder %s23, 3
    %p182 = por %p180, %p181
    %p183 = scmp.ne.s32.totalorder %s175, %s178
    %p184 = scmp.eq.s32.totalorder %s23, 0
    %p185 = por %p183, %p184
    %p186 = scmp.ne.s32.totalorder %s175, %s178
    %p187 = scmp.eq.s32.totalorder %s28, 3
    %p188 = por %p186, %p187
    %p189 = scmp.ne.s32.totalorder %s178, %s179
    %p190 = scmp.eq.s32.totalorder %s28, 0
    %p191 = por %p189, %p190
    %p192 = scmp.ne.s32.totalorder %s178, %s179
    %p193 = scmp.eq.s32.totalorder %s29, 3
    %p194 = por %p192, %p193
    %p196 = scmp.ne.s32.totalorder %s179, %s195
    %p197 = scmp.eq.s32.totalorder %s29, 0
    %p198 = por %p196, %p197
    %s199 = ssub.s32 %s31, %s38
    %p200 = scmp.eq.s32.totalorder %s199, 0
    %s202 = sadd.s32 %s201, 1
    %s203 = scalar_select %p200, %s201, %s202
    %p206 = pneg %p200
    %p207 = scmp.eq.s32.totalorder %s23, 3
    %p208 = por %p206, %p207
    %p209 = scmp.ne.s32.totalorder %s201, %s204
    %p210 = scmp.eq.s32.totalorder %s23, 0
    %p211 = por %p209, %p210
    %p212 = scmp.ne.s32.totalorder %s201, %s204
    %p213 = scmp.eq.s32.totalorder %s28, 3
    %p214 = por %p212, %p213
    %p215 = scmp.ne.s32.totalorder %s204, %s205
    %p216 = scmp.eq.s32.totalorder %s28, 0
    %p217 = por %p215, %p216
    %p218 = scmp.ne.s32.totalorder %s204, %s205
    %p219 = scmp.eq.s32.totalorder %s29, 3
    %p220 = por %p218, %p219
    %p222 = scmp.ne.s32.totalorder %s205, %s221
    %p223 = scmp.eq.s32.totalorder %s29, 0
    %p224 = por %p222, %p223
    %s225 = ssub.s32 %s31, %s38
    %p226 = scmp.eq.s32.totalorder %s225, 0
    %s228 = sadd.s32 %s227, 1
    %s229 = scalar_select %p226, %s227, %s228
    %p232 = pneg %p226
    %p233 = scmp.eq.s32.totalorder %s23, 3
    %p234 = por %p232, %p233
    %p235 = scmp.ne.s32.totalorder %s227, %s230
    %p236 = scmp.eq.s32.totalorder %s23, 0
    %p237 = por %p235, %p236
    %p238 = scmp.ne.s32.totalorder %s227, %s230
    %p239 = scmp.eq.s32.totalorder %s28, 3
    %p240 = por %p238, %p239
    %p241 = scmp.ne.s32.totalorder %s230, %s231
    %p242 = scmp.eq.s32.totalorder %s28, 0
    %p243 = por %p241, %p242
    %p244 = scmp.ne.s32.totalorder %s230, %s231
    %p245 = scmp.eq.s32.totalorder %s29, 3
    %p246 = por %p244, %p245
    %p248 = scmp.ne.s32.totalorder %s231, %s247
    %p249 = scmp.eq.s32.totalorder %s29, 0
    %p250 = por %p248, %p249
    %s251 = ssub.s32 %s31, %s38
    %p252 = scmp.eq.s32.totalorder %s251, 0
    %s254 = sadd.s32 %s253, 1
    %s255 = scalar_select %p252, %s253, %s254
    %p258 = pneg %p252
    %p259 = scmp.eq.s32.totalorder %s23, 3
    %p260 = por %p258, %p259
    %p261 = scmp.ne.s32.totalorder %s253, %s256
    %p262 = scmp.eq.s32.totalorder %s23, 0
    %p263 = por %p261, %p262
    %p264 = scmp.ne.s32.totalorder %s253, %s256
    %p265 = scmp.eq.s32.totalorder %s28, 3
    %p266 = por %p264, %p265
    %p267 = scmp.ne.s32.totalorder %s256, %s257
    %p268 = scmp.eq.s32.totalorder %s28, 0
    %p269 = por %p267, %p268
    %p270 = scmp.ne.s32.totalorder %s256, %s257
    %p271 = scmp.eq.s32.totalorder %s29, 3
    %p272 = por %p270, %p271
    %p274 = scmp.ne.s32.totalorder %s257, %s273
    %p275 = scmp.eq.s32.totalorder %s29, 0
    %p276 = por %p274, %p275
    %s277 = ssub.s32 %s31, %s38
    %p278 = scmp.eq.s32.totalorder %s277, 0
    %s280 = sadd.s32 %s279, 1
    %s281 = scalar_select %p278, %s279, %s280
    %p284 = pneg %p278
    %p285 = scmp.eq.s32.totalorder %s23, 3
    %p286 = por %p284, %p285
    %p287 = scmp.ne.s32.totalorder %s279, %s282
    %p288 = scmp.eq.s32.totalorder %s23, 0
    %p289 = por %p287, %p288
    %p290 = scmp.ne.s32.totalorder %s279, %s282
    %p291 = scmp.eq.s32.totalorder %s28, 3
    %p292 = por %p290, %p291
    %p293 = scmp.ne.s32.totalorder %s282, %s283
    %p294 = scmp.eq.s32.totalorder %s28, 0
    %p295 = por %p293, %p294
    %p296 = scmp.ne.s32.totalorder %s282, %s283
    %p297 = scmp.eq.s32.totalorder %s29, 3
    %p298 = por %p296, %p297
    %p300 = scmp.ne.s32.totalorder %s283, %s299
    %p301 = scmp.eq.s32.totalorder %s29, 0
    %p302 = por %p300, %p301
    %s303 = ssub.s32 %s31, %s38
    %p304 = scmp.eq.s32.totalorder %s303, 0
    %s306 = sadd.s32 %s305, 1
    %s307 = scalar_select %p304, %s305, %s306
    %p310 = pneg %p304
    %p311 = scmp.eq.s32.totalorder %s23, 3
    %p312 = por %p310, %p311
    %p313 = scmp.ne.s32.totalorder %s305, %s308
    %p314 = scmp.eq.s32.totalorder %s23, 0
    %p315 = por %p313, %p314
    %p316 = scmp.ne.s32.totalorder %s305, %s308
    %p317 = scmp.eq.s32.totalorder %s28, 3
    %p318 = por %p316, %p317
    %p319 = scmp.ne.s32.totalorder %s308, %s309
    %p320 = scmp.eq.s32.totalorder %s28, 0
    %p321 = por %p319, %p320
    %p322 = scmp.ne.s32.totalorder %s308, %s309
    %p323 = scmp.eq.s32.totalorder %s29, 3
    %p324 = por %p322, %p323
    %p326 = scmp.ne.s32.totalorder %s309, %s325
    %p327 = scmp.eq.s32.totalorder %s29, 0
    %p328 = por %p326, %p327
    %s329 = ssub.s32 %s31, %s38
    %p330 = scmp.eq.s32.totalorder %s329, 0
    %s332 = sadd.s32 %s331, 1
    %s333 = scalar_select %p330, %s331, %s332
    %p336 = pneg %p330
    %p337 = scmp.eq.s32.totalorder %s23, 3
    %p338 = por %p336, %p337
    %p339 = scmp.ne.s32.totalorder %s331, %s334
    %p340 = scmp.eq.s32.totalorder %s23, 0
    %p341 = por %p339, %p340
    %p342 = scmp.ne.s32.totalorder %s331, %s334
    %p343 = scmp.eq.s32.totalorder %s28, 3
    %p344 = por %p342, %p343
    %p345 = scmp.ne.s32.totalorder %s334, %s335
    %p346 = scmp.eq.s32.totalorder %s28, 0
    %p347 = por %p345, %p346
    %p348 = scmp.ne.s32.totalorder %s334, %s335
    %p349 = scmp.eq.s32.totalorder %s29, 3
    %p350 = por %p348, %p349
    %p352 = scmp.ne.s32.totalorder %s335, %s351
    %p353 = scmp.eq.s32.totalorder %s29, 0
    %p354 = por %p352, %p353
    %s355 = ssub.s32 %s31, %s38
    %p356 = scmp.eq.s32.totalorder %s355, 0
    %s358 = sadd.s32 %s357, 1
    %s359 = scalar_select %p356, %s357, %s358
    %p362 = pneg %p356
    %p363 = scmp.eq.s32.totalorder %s23, 3
    %p364 = por %p362, %p363
    %p365 = scmp.ne.s32.totalorder %s357, %s360
    %p366 = scmp.eq.s32.totalorder %s23, 0
    %p367 = por %p365, %p366
    %p368 = scmp.ne.s32.totalorder %s357, %s360
    %p369 = scmp.eq.s32.totalorder %s28, 3
    %p370 = por %p368, %p369
    %p371 = scmp.ne.s32.totalorder %s360, %s361
    %p372 = scmp.eq.s32.totalorder %s28, 0
    %p373 = por %p371, %p372
    %p374 = scmp.ne.s32.totalorder %s360, %s361
    %p375 = scmp.eq.s32.totalorder %s29, 3
    %p376 = por %p374, %p375
    %p378 = scmp.ne.s32.totalorder %s361, %s377
    %p379 = scmp.eq.s32.totalorder %s29, 0
    %p380 = por %p378, %p379
    %s381 = ssub.s32 %s31, %s38
    %p382 = scmp.eq.s32.totalorder %s381, 0
    %s384 = sadd.s32 %s383, 1
    %s385 = scalar_select %p382, %s383, %s384
    %p388 = pneg %p382
    %p389 = scmp.eq.s32.totalorder %s23, 3
    %p390 = por %p388, %p389
    %p391 = scmp.ne.s32.totalorder %s383, %s386
    %p392 = scmp.eq.s32.totalorder %s23, 0
    %p393 = por %p391, %p392
    %p394 = scmp.ne.s32.totalorder %s383, %s386
    %p395 = scmp.eq.s32.totalorder %s28, 3
    %p396 = por %p394, %p395
    %p397 = scmp.ne.s32.totalorder %s386, %s387
    %p398 = scmp.eq.s32.totalorder %s28, 0
    %p399 = por %p397, %p398
    %p400 = scmp.ne.s32.totalorder %s386, %s387
    %p401 = scmp.eq.s32.totalorder %s29, 3
    %p402 = por %p400, %p401
    %p404 = scmp.ne.s32.totalorder %s387, %s403
    %p405 = scmp.eq.s32.totalorder %s29, 0
    %p406 = por %p404, %p405
    %s407 = ssub.s32 %s31, %s38
    %p408 = scmp.eq.s32.totalorder %s407, 0
    %s410 = sadd.s32 %s409, 1
    %s411 = scalar_select %p408, %s409, %s410
    %p414 = pneg %p408
    %p415 = scmp.eq.s32.totalorder %s23, 3
    %p416 = por %p414, %p415
    %p417 = scmp.ne.s32.totalorder %s409, %s412
    %p418 = scmp.eq.s32.totalorder %s23, 0
    %p419 = por %p417, %p418
    %p420 = scmp.ne.s32.totalorder %s409, %s412
    %p421 = scmp.eq.s32.totalorder %s28, 3
    %p422 = por %p420, %p421
    %p423 = scmp.ne.s32.totalorder %s412, %s413
    %p424 = scmp.eq.s32.totalorder %s28, 0
    %p425 = por %p423, %p424
    %p426 = scmp.ne.s32.totalorder %s412, %s413
    %p427 = scmp.eq.s32.totalorder %s29, 3
    %p428 = por %p426, %p427
    %p430 = scmp.ne.s32.totalorder %s413, %s429
    %p431 = scmp.eq.s32.totalorder %s29, 0
    %p432 = por %p430, %p431
    %s433 = ssub.s32 %s31, %s38
    %p434 = scmp.eq.s32.totalorder %s433, 0
    %s436 = sadd.s32 %s435, 1
    %s437 = scalar_select %p434, %s435, %s436
    %p440 = pneg %p434
    %p441 = scmp.eq.s32.totalorder %s23, 3
    %p442 = por %p440, %p441
    %p443 = scmp.ne.s32.totalorder %s435, %s438
    %p444 = scmp.eq.s32.totalorder %s23, 0
    %p445 = por %p443, %p444
    %p446 = scmp.ne.s32.totalorder %s435, %s438
    %p447 = scmp.eq.s32.totalorder %s28, 3
    %p448 = por %p446, %p447
    %p449 = scmp.ne.s32.totalorder %s438, %s439
    %p450 = scmp.eq.s32.totalorder %s28, 0
    %p451 = por %p449, %p450
    %p452 = scmp.ne.s32.totalorder %s438, %s439
    %p453 = scmp.eq.s32.totalorder %s29, 3
    %p454 = por %p452, %p453
    %p456 = scmp.ne.s32.totalorder %s439, %s455
    %p457 = scmp.eq.s32.totalorder %s29, 0
    %p458 = por %p456, %p457
    %s459 = ssub.s32 %s31, %s38
    %p460 = scmp.eq.s32.totalorder %s459, 0
    %s462 = sadd.s32 %s461, 1
    %s463 = scalar_select %p460, %s461, %s462
    %p466 = pneg %p460
    %p467 = scmp.eq.s32.totalorder %s23, 3
    %p468 = por %p466, %p467
    %p469 = scmp.ne.s32.totalorder %s461, %s464
    %p470 = scmp.eq.s32.totalorder %s23, 0
    %p471 = por %p469, %p470
    %p472 = scmp.ne.s32.totalorder %s461, %s464
    %p473 = scmp.eq.s32.totalorder %s28, 3
    %p474 = por %p472, %p473
    %p475 = scmp.ne.s32.totalorder %s464, %s465
    %p476 = scmp.eq.s32.totalorder %s28, 0
    %p477 = por %p475, %p476
    %p478 = scmp.ne.s32.totalorder %s464, %s465
    %p479 = scmp.eq.s32.totalorder %s29, 3
    %p480 = por %p478, %p479
    %p482 = scmp.ne.s32.totalorder %s465, %s481
    %p483 = scmp.eq.s32.totalorder %s29, 0
    %p484 = por %p482, %p483
    %s485 = ssub.s32 %s31, %s38
    %s486 = ssub.s32 %s30, %s42
    %s487 = sor.u32 %s485, %s486
    %p488 = scmp.eq.s32.totalorder %s487, 0
    %s490 = sadd.s32 %s489, 1
    %s491 = scalar_select %p488, %s489, %s490
    %p494 = pneg %p488
    %p495 = scmp.eq.s32.totalorder %s23, 3
    %p496 = por %p494, %p495
    %p497 = scmp.ne.s32.totalorder %s489, %s492
    %p498 = scmp.eq.s32.totalorder %s23, 0
    %p499 = por %p497, %p498
    %p500 = scmp.ne.s32.totalorder %s489, %s492
    %p501 = scmp.eq.s32.totalorder %s28, 3
    %p502 = por %p500, %p501
    %p503 = scmp.ne.s32.totalorder %s492, %s493
    %p504 = scmp.eq.s32.totalorder %s28, 0
    %p505 = por %p503, %p504
    %p506 = scmp.ne.s32.totalorder %s492, %s493
    %p507 = scmp.eq.s32.totalorder %s29, 3
    %p508 = por %p506, %p507
    %p510 = scmp.ne.s32.totalorder %s493, %s509
    %p511 = scmp.eq.s32.totalorder %s29, 0
    %p512 = por %p510, %p511
    %p513 = scmp.le.s32.totalorder 1, %s23
    %p514 = scmp.lt.s32.totalorder %s23, 5
    %p515 = pnand %p513, %p514
    %p516 = pneg %p515
    // Predicated region
    $region9: #{encoder_forward.1} parent=5 // pred_check
      _
    $region10: #{encoder_forward.1} parent=5 // pred_check_branch
      %518 = sbr.rel (%p515) target = $region12
    $region11: #{encoder_forward.1} parent=5 // pred_region
      %s519 = ssub.s32 %s23, 1
    $region12: #{encoder_forward.1} parent=5 // pred_fallthru
      _
    %p520 = scmp.lt.s32.totalorder %s23, 4
    // Predicated region
    $region13: #{encoder_forward.1} parent=5 // pred_check
      %p521 = pneg %p520
    $region14: #{encoder_forward.1} parent=5 // pred_check_branch
      %523 = sbr.rel (%p521) target = $region16
    $region15: #{encoder_forward.1} parent=5 // pred_region
      // Predicated region
      $region17: #{encoder_forward.1} parent=15 // pred_check
        %p524 = pneg %p55
      $region18: #{encoder_forward.1} parent=15 // pred_check_branch
        %526 = sbr.rel (%p524) target = $region20
      $region19: #{encoder_forward.1} parent=15 // pred_region
        %p527 = scmp.lt.s32.totalorder %s30, 1
        %s528 = scalar_select %p527, %s30, 1
        %s529 = smul.addr %s528, 8
        %s530 = scalar_lea.vmem %s0, %s529
      $region20: #{encoder_forward.1} parent=15 // pred_fallthru
        _
      // Predicated region
      $region21: #{encoder_forward.1} parent=15 // pred_check
        %p531 = pneg %p81
      $region22: #{encoder_forward.1} parent=15 // pred_check_branch
        %533 = sbr.rel (%p531) target = $region24
      $region23: #{encoder_forward.1} parent=15 // pred_region
        %p534 = scmp.lt.s32.totalorder %s31, 1
        %s535 = scalar_select %p534, %s31, 1
        %s536 = smul.addr %s535, 8
        %s537 = smul.addr %s536, 4
        %s538 = scalar_lea.vmem %s1, %s537
      $region24: #{encoder_forward.1} parent=15 // pred_fallthru
        _
      // Predicated region
      $region25: #{encoder_forward.1} parent=15 // pred_check
        %p539 = pneg %p107
      $region26: #{encoder_forward.1} parent=15 // pred_check_branch
        %541 = sbr.rel (%p539) target = $region28
      $region27: #{encoder_forward.1} parent=15 // pred_region
        %p542 = scmp.lt.s32.totalorder %s31, 1
        %s543 = scalar_select %p542, %s31, 1
        %s544 = smul.addr %s543, 2
        %s545 = scalar_lea.vmem %s2, %s544
      $region28: #{encoder_forward.1} parent=15 // pred_fallthru
        _
      // Predicated region
      $region29: #{encoder_forward.1} parent=15 // pred_check
        %p546 = pneg %p133
      $region30: #{encoder_forward.1} parent=15 // pred_check_branch
        %548 = sbr.rel (%p546) target = $region32
      $region31: #{encoder_forward.1} parent=15 // pred_region
        %p549 = scmp.lt.s32.totalorder %s31, 1
        %s550 = scalar_select %p549, %s31, 1
        %s551 = smul.addr %s550, 8
        %s552 = smul.addr %s551, 4
        %s553 = scalar_lea.vmem %s3, %s552
      $region32: #{encoder_forward.1} parent=15 // pred_fallthru
        _
      // Predicated region
      $region33: #{encoder_forward.1} parent=15 // pred_check
        %p554 = pneg %p159
      $region34: #{encoder_forward.1} parent=15 // pred_check_branch
        %556 = sbr.rel (%p554) target = $region36
      $region35: #{encoder_forward.1} parent=15 // pred_region
        %p557 = scmp.lt.s32.totalorder %s31, 1
        %s558 = scalar_select %p557, %s31, 1
        %s559 = scalar_lea.vmem %s4, %s558
      $region36: #{encoder_forward.1} parent=15 // pred_fallthru
        _
      // Predicated region
      $region37: #{encoder_forward.1} parent=15 // pred_check
        %p560 = pneg %p185
      $region38: #{encoder_forward.1} parent=15 // pred_check_branch
        %562 = sbr.rel (%p560) target = $region40
      $region39: #{encoder_forward.1} parent=15 // pred_region
        %p563 = scmp.lt.s32.totalorder %s31, 1
        %s564 = scalar_select %p563, %s31, 1
        %s565 = smul.addr %s564, 4
        %s566 = smul.addr %s565, 4
        %s567 = scalar_lea.vmem %s5, %s566
      $region40: #{encoder_forward.1} parent=15 // pred_fallthru
        _
      // Predicated region
      $region41: #{encoder_forward.1} parent=15 // pred_check
        %p568 = pneg %p211
      $region42: #{encoder_forward.1} parent=15 // pred_check_branch
        %570 = sbr.rel (%p568) target = $region44
      $region43: #{encoder_forward.1} parent=15 // pred_region
        %p571 = scmp.lt.s32.totalorder %s31, 1
        %s572 = scalar_select %p571, %s31, 1
        %s573 = scalar_lea.vmem %s6, %s572
      $region44: #{encoder_forward.1} parent=15 // pred_fallthru
        _
      // Predicated region
      $region45: #{encoder_forward.1} parent=15 // pred_check
        %p574 = pneg %p237
      $region46: #{encoder_forward.1} parent=15 // pred_check_branch
        %576 = sbr.rel (%p574) target = $region48
      $region47: #{encoder_forward.1} parent=15 // pred_region
        %p577 = scmp.lt.s32.totalorder %s31, 1
        %s578 = scalar_select %p577, %s31, 1
        %s579 = scalar_lea.vmem %s7, %s578
      $region48: #{encoder_forward.1} parent=15 // pred_fallthru
        _
      // Predicated region
      $region49: #{encoder_forward.1} parent=15 // pred_check
        %p580 = pneg %p263
      $region50: #{encoder_forward.1} parent=15 // pred_check_branch
        %582 = sbr.rel (%p580) target = $region52
      $region51: #{encoder_forward.1} parent=15 // pred_region
        %p583 = scmp.lt.s32.totalorder %s31, 1
        %s584 = scalar_select %p583, %s31, 1
        %s585 = scalar_lea.vmem %s8, %s584
      $region52: #{encoder_forward.1} parent=15 // pred_fallthru
        _
      // Predicated region
      $region53: #{encoder_forward.1} parent=15 // pred_check
        %p586 = pneg %p289
      $region54: #{encoder_forward.1} parent=15 // pred_check_branch
        %588 = sbr.rel (%p586) target = $region56
      $region55: #{encoder_forward.1} parent=15 // pred_region
        %p589 = scmp.lt.s32.totalorder %s31, 1
        %s590 = scalar_select %p589, %s31, 1
        %s591 = smul.addr %s590, 4
        %s592 = smul.addr %s591, 4
        %s593 = scalar_lea.vmem %s9, %s592
      $region56: #{encoder_forward.1} parent=15 // pred_fallthru
        _
      // Predicated region
      $region57: #{encoder_forward.1} parent=15 // pred_check
        %p594 = pneg %p315
      $region58: #{encoder_forward.1} parent=15 // pred_check_branch
        %596 = sbr.rel (%p594) target = $region60
      $region59: #{encoder_forward.1} parent=15 // pred_region
        %p597 = scmp.lt.s32.totalorder %s31, 1
        %s598 = scalar_select %p597, %s31, 1
        %s599 = scalar_lea.vmem %s10, %s598
      $region60: #{encoder_forward.1} parent=15 // pred_fallthru
        _
      // Predicated region
      $region61: #{encoder_forward.1} parent=15 // pred_check
        %p600 = pneg %p341
      $region62: #{encoder_forward.1} parent=15 // pred_check_branch
        %602 = sbr.rel (%p600) target = $region64
      $region63: #{encoder_forward.1} parent=15 // pred_region
        %p603 = scmp.lt.s32.totalorder %s31, 1
        %s604 = scalar_select %p603, %s31, 1
        %s605 = smul.addr %s604, 8
        %s606 = smul.addr %s605, 4
        %s607 = scalar_lea.vmem %s11, %s606
      $region64: #{encoder_forward.1} parent=15 // pred_fallthru
        _
      // Predicated region
      $region65: #{encoder_forward.1} parent=15 // pred_check
        %p608 = pneg %p367
      $region66: #{encoder_forward.1} parent=15 // pred_check_branch
        %610 = sbr.rel (%p608) target = $region68
      $region67: #{encoder_forward.1} parent=15 // pred_region
        %p611 = scmp.lt.s32.totalorder %s31, 1
        %s612 = scalar_select %p611, %s31, 1
        %s613 = scalar_lea.vmem %s12, %s612
      $region68: #{encoder_forward.1} parent=15 // pred_fallthru
        _
      // Predicated region
      $region69: #{encoder_forward.1} parent=15 // pred_check
        %p614 = pneg %p393
      $region70: #{encoder_forward.1} parent=15 // pred_check_branch
        %616 = sbr.rel (%p614) target = $region72
      $region71: #{encoder_forward.1} parent=15 // pred_region
        %p617 = scmp.lt.s32.totalorder %s31, 1
        %s618 = scalar_select %p617, %s31, 1
        %s619 = smul.addr %s618, 8
        %s620 = smul.addr %s619, 4
        %s621 = scalar_lea.vmem %s13, %s620
      $region72: #{encoder_forward.1} parent=15 // pred_fallthru
        _
      // Predicated region
      $region73: #{encoder_forward.1} parent=15 // pred_check
        %p622 = pneg %p419
      $region74: #{encoder_forward.1} parent=15 // pred_check_branch
        %624 = sbr.rel (%p622) target = $region76
      $region75: #{encoder_forward.1} parent=15 // pred_region
        %p625 = scmp.lt.s32.totalorder %s31, 1
        %s626 = scalar_select %p625, %s31, 1
        %s627 = scalar_lea.vmem %s14, %s626
      $region76: #{encoder_forward.1} parent=15 // pred_fallthru
        _
      // Predicated region
      $region77: #{encoder_forward.1} parent=15 // pred_check
        %p628 = pneg %p445
      $region78: #{encoder_forward.1} parent=15 // pred_check_branch
        %630 = sbr.rel (%p628) target = $region80
      $region79: #{encoder_forward.1} parent=15 // pred_region
        %p631 = scmp.lt.s32.totalorder %s31, 1
        %s632 = scalar_select %p631, %s31, 1
        %s633 = scalar_lea.vmem %s15, %s632
      $region80: #{encoder_forward.1} parent=15 // pred_fallthru
        _
      // Predicated region
      $region81: #{encoder_forward.1} parent=15 // pred_check
        %p634 = pneg %p471
      $region82: #{encoder_forward.1} parent=15 // pred_check_branch
        %636 = sbr.rel (%p634) target = $region84
      $region83: #{encoder_forward.1} parent=15 // pred_region
        %p637 = scmp.lt.s32.totalorder %s31, 1
        %s638 = scalar_select %p637, %s31, 1
        %s639 = scalar_lea.vmem %s16, %s638
      $region84: #{encoder_forward.1} parent=15 // pred_fallthru
        _
    $region16: #{encoder_forward.1} parent=5 // pred_fallthru
      _
    %p640 = scmp.le.s32.totalorder 1, %s23
    %p641 = scmp.lt.s32.totalorder %s23, 5
    %p642 = pnand %p640, %p641
    %p643 = pneg %p642
    // Predicated region
    $region85: #{encoder_forward.1} parent=5 // pred_check
      _
    $region86: #{encoder_forward.1} parent=5 // pred_check_branch
      %645 = sbr.rel (%p642) target = $region88
    $region87: #{encoder_forward.1} parent=5 // pred_region
      %s646 = ssub.s32 %s23, 1
      %p647 = scmp.lt.s32.totalorder %s32, 1
      %s648 = scalar_select %p647, %s32, 1
      %s649 = smul.addr %s648, 8
      %s650 = scalar_lea.vmem %s0, %s649
      %p651 = pneg %p61
      %p652 = pneg %p58
      %p653 = scmp.lt.s32.totalorder %s33, 1
      %s654 = scalar_select %p653, %s33, 1
      %s655 = smul.addr %s654, 8
      %s656 = smul.addr %s655, 4
      %s657 = scalar_lea.vmem %s1, %s656
      %p658 = pneg %p87
      %p659 = pneg %p84
      %p660 = scmp.lt.s32.totalorder %s33, 1
      %s661 = scalar_select %p660, %s33, 1
      %s662 = smul.addr %s661, 2
      %s663 = scalar_lea.vmem %s2, %s662
      %p664 = pneg %p113
      %p665 = pneg %p110
      %p666 = scmp.lt.s32.totalorder %s33, 1
      %s667 = scalar_select %p666, %s33, 1
      %s668 = smul.addr %s667, 8
      %s669 = smul.addr %s668, 4
      %s670 = scalar_lea.vmem %s3, %s669
      %p671 = pneg %p139
      %p672 = pneg %p136
      %p673 = scmp.lt.s32.totalorder %s33, 1
      %s674 = scalar_select %p673, %s33, 1
      %s675 = scalar_lea.vmem %s4, %s674
      %p676 = pneg %p165
      %p677 = pneg %p162
      %p678 = scmp.lt.s32.totalorder %s33, 1
      %s679 = scalar_select %p678, %s33, 1
      %s680 = smul.addr %s679, 4
      %s681 = smul.addr %s680, 4
      %s682 = scalar_lea.vmem %s5, %s681
      %p683 = pneg %p191
      %p684 = pneg %p188
      %p685 = scmp.lt.s32.totalorder %s33, 1
      %s686 = scalar_select %p685, %s33, 1
      %s687 = scalar_lea.vmem %s6, %s686
      %p688 = pneg %p217
      %p689 = pneg %p214
      %p690 = scmp.lt.s32.totalorder %s33, 1
      %s691 = scalar_select %p690, %s33, 1
      %s692 = scalar_lea.vmem %s7, %s691
      %p693 = pneg %p243
      %p694 = pneg %p240
      %p695 = scmp.lt.s32.totalorder %s33, 1
      %s696 = scalar_select %p695, %s33, 1
      %s697 = scalar_lea.vmem %s8, %s696
      %p698 = pneg %p269
      %p699 = pneg %p266
      %p700 = scmp.lt.s32.totalorder %s33, 1
      %s701 = scalar_select %p700, %s33, 1
      %s702 = smul.addr %s701, 4
      %s703 = smul.addr %s702, 4
      %s704 = scalar_lea.vmem %s9, %s703
      %p705 = pneg %p295
      %p706 = pneg %p292
      %p707 = scmp.lt.s32.totalorder %s33, 1
      %s708 = scalar_select %p707, %s33, 1
      %s709 = scalar_lea.vmem %s10, %s708
      %p710 = pneg %p321
      %p711 = pneg %p318
      %p712 = scmp.lt.s32.totalorder %s33, 1
      %s713 = scalar_select %p712, %s33, 1
      %s714 = smul.addr %s713, 8
      %s715 = smul.addr %s714, 4
      %s716 = scalar_lea.vmem %s11, %s715
      %p717 = pneg %p347
      %p718 = pneg %p344
      %p719 = scmp.lt.s32.totalorder %s33, 1
      %s720 = scalar_select %p719, %s33, 1
      %s721 = scalar_lea.vmem %s12, %s720
      %p722 = pneg %p373
      %p723 = pneg %p370
      %p724 = scmp.lt.s32.totalorder %s33, 1
      %s725 = scalar_select %p724, %s33, 1
      %s726 = smul.addr %s725, 8
      %s727 = smul.addr %s726, 4
      %s728 = scalar_lea.vmem %s13, %s727
      %p729 = pneg %p399
      %p730 = pneg %p396
      %p731 = scmp.lt.s32.totalorder %s33, 1
      %s732 = scalar_select %p731, %s33, 1
      %s733 = scalar_lea.vmem %s14, %s732
      %p734 = pneg %p425
      %p735 = pneg %p422
      %p736 = scmp.lt.s32.totalorder %s33, 1
      %s737 = scalar_select %p736, %s33, 1
      %s738 = scalar_lea.vmem %s15, %s737
      %p739 = pneg %p451
      %p740 = pneg %p448
      %p741 = scmp.lt.s32.totalorder %s33, 1
      %s742 = scalar_select %p741, %s33, 1
      %s743 = scalar_lea.vmem %s16, %s742
      %p744 = pneg %p477
      %p745 = pneg %p474
      %p746 = pneg %p505
      %p747 = pneg %p502
      %p748 = scmp.lt.s32.totalorder %s33, 1
      %s749 = scalar_select %p748, %s33, 1
      %p750 = scmp.lt.s32.totalorder %s32, 1
      %s751 = scalar_select %p750, %s32, 1
      %s752 = smul.addr %s749, 2
      %s753 = sadd.s32 %s751, %s752
      %s754 = smul.addr %s753, 8
      %s755 = scalar_lea.vmem %s17, %s754
      %p756 = scmp.lt.s32.totalorder %s32, 1
      %s757 = scalar_select %p756, %s32, 1
      %s758 = smul.addr %s757, 8
      %s759 = scalar_lea.vmem %s0, %s758
      %p760 = scmp.lt.s32.totalorder %s33, 1
      %s761 = scalar_select %p760, %s33, 1
      %s762 = smul.addr %s761, 8
      %s763 = smul.addr %s762, 4
      %s764 = scalar_lea.vmem %s1, %s763
      %p765 = scmp.lt.s32.totalorder %s33, 1
      %s766 = scalar_select %p765, %s33, 1
      %s767 = smul.addr %s766, 2
      %s768 = scalar_lea.vmem %s2, %s767
      %p769 = scmp.lt.s32.totalorder %s33, 1
      %s770 = scalar_select %p769, %s33, 1
      %s771 = smul.addr %s770, 8
      %s772 = smul.addr %s771, 4
      %s773 = scalar_lea.vmem %s3, %s772
      %p774 = scmp.lt.s32.totalorder %s33, 1
      %s775 = scalar_select %p774, %s33, 1
      %s776 = scalar_lea.vmem %s4, %s775
      %p777 = scmp.lt.s32.totalorder %s33, 1
      %s778 = scalar_select %p777, %s33, 1
      %s779 = smul.addr %s778, 4
      %s780 = smul.addr %s779, 4
      %s781 = scalar_lea.vmem %s5, %s780
      %p782 = scmp.lt.s32.totalorder %s33, 1
      %s783 = scalar_select %p782, %s33, 1
      %s784 = scalar_lea.vmem %s6, %s783
      %p785 = scmp.lt.s32.totalorder %s33, 1
      %s786 = scalar_select %p785, %s33, 1
      %s787 = scalar_lea.vmem %s7, %s786
      %p788 = scmp.lt.s32.totalorder %s33, 1
      %s789 = scalar_select %p788, %s33, 1
      %s790 = scalar_lea.vmem %s8, %s789
      %p791 = scmp.lt.s32.totalorder %s33, 1
      %s792 = scalar_select %p791, %s33, 1
      %s793 = smul.addr %s792, 4
      %s794 = smul.addr %s793, 4
      %s795 = scalar_lea.vmem %s9, %s794
      %p796 = scmp.lt.s32.totalorder %s33, 1
      %s797 = scalar_select %p796, %s33, 1
      %s798 = scalar_lea.vmem %s10, %s797
      %p799 = scmp.lt.s32.totalorder %s33, 1
      %s800 = scalar_select %p799, %s33, 1
      %s801 = smul.addr %s800, 8
      %s802 = smul.addr %s801, 4
      %s803 = scalar_lea.vmem %s11, %s802
      %p804 = scmp.lt.s32.totalorder %s33, 1
      %s805 = scalar_select %p804, %s33, 1
      %s806 = scalar_lea.vmem %s12, %s805
      %p807 = scmp.lt.s32.totalorder %s33, 1
      %s808 = scalar_select %p807, %s33, 1
      %s809 = smul.addr %s808, 8
      %s810 = smul.addr %s809, 4
      %s811 = scalar_lea.vmem %s13, %s810
      %p812 = scmp.lt.s32.totalorder %s33, 1
      %s813 = scalar_select %p812, %s33, 1
      %s814 = scalar_lea.vmem %s14, %s813
      %p815 = scmp.lt.s32.totalorder %s33, 1
      %s816 = scalar_select %p815, %s33, 1
      %s817 = scalar_lea.vmem %s15, %s816
      %p818 = scmp.lt.s32.totalorder %s33, 1
      %s819 = scalar_select %p818, %s33, 1
      %s820 = scalar_lea.vmem %s16, %s819
      %p821 = scmp.lt.s32.totalorder %s33, 1
      %s822 = scalar_select %p821, %s33, 1
      %p823 = scmp.lt.s32.totalorder %s32, 1
      %s824 = scalar_select %p823, %s32, 1
      %s825 = smul.addr %s822, 2
      %s826 = sadd.s32 %s824, %s825
      %s827 = smul.addr %s826, 8
      %s828 = scalar_lea.vmem %s17, %s827
      %p830 = scmp.eq.s32.totalorder %s33, 0
      // Predicated region
      $region89: #{encoder_forward.1} parent=87 // pred_check
        %p831 = pneg %p830
      $region90: #{encoder_forward.1} parent=87 // pred_check_branch
        %833 = sbr.rel (%p831) target = $region92
      $region91: #{encoder_forward.1} parent=87 // pred_region
        %v834 = vld [vmem:[%s759] sm:$0xff]
        %vm835 = vcmask 261120
        %836 = vst.msk [vmem:[#allocation2] sm:$0xff] %vm835, %v834
      $region92: #{encoder_forward.1} parent=87 // pred_fallthru
        _
      %v837 = vld [vmem:[#allocation2] sm:$0xff]
      %v838 = vpack.c.bf16 %v837, %v837
      %v839 = vld [vmem:[%s764] sm:$0xff]
      %v840 = vld [vmem:[%s764 + $0x8] sm:$0xff]
      %v841 = vld [vmem:[%s764 + $0x10] sm:$0xff]
      %v842 = vld [vmem:[%s764 + $0x18] sm:$0xff]
      %v843 = vld [vmem:[%s768] sm:$0x3]
      %v845 = vlaneseq
      %v846 = vshrl.u32 %v845, 7
      %v847 = vsub.s32 0, %v846
      %v848 = vrot.slane %v843, %v847
      %v849 = vlaneseq
      %v850 = vshrl.u32 %v849, 7
      %v851 = vsub.s32 1, %v850
      %v852 = vrot.slane %v843, %v851
      %v859 = vunpack.c.l.b16 %v839
      %v860 = vunpack.c.h.b16 %v839
      %v861 = vunpack.c.l.b16 %v840
      %v862 = vunpack.c.h.b16 %v840
      %v863 = vunpack.c.l.b16 %v841
      %v864 = vunpack.c.h.b16 %v841
      %v865 = vunpack.c.l.b16 %v842
      %v866 = vunpack.c.h.b16 %v842
      %v867 = vpack.c.b16 %v861, %v859
      %v868 = vpack.c.b16 %v862, %v860
      %v869 = vpack.c.b16 %v865, %v863
      %v870 = vpack.c.b16 %v866, %v864
      %vm875 = vcmask 261120
      %v877 = vsel %vm875, %v838, 0
      %879 = vmatprep.subr.bf16.mxu0 %v868
      %880 = vmatpush1.bf16.msra.mxu0 %v867
      %881 = vmatprep.subr.bf16.mxu0 %v870
      %882 = vmatpush1.bf16.msra.mxu0 %v869
      %883 = vmatprep.subr.bf16.mxu0 0
      %884 = vmatpush1.bf16.msra.mxu0 0
      %885 = vmatprep.subr.bf16.mxu0 0
      %886 = vmatpush1.bf16.msra.mxu0 0
      %887 = vmatprep.subr.bf16.mxu0 0
      %888 = vmatpush1.bf16.msra.mxu0 0
      %889 = vmatprep.subr.bf16.mxu0 0
      %890 = vmatpush1.bf16.msra.mxu0 0
      %891 = vmatprep.subr.bf16.mxu0 0
      %892 = vmatpush1.bf16.msra.mxu0 0
      %893 = vmatprep.subr.bf16.mxu0 0
      %894 = vmatpush1.bf16.msra.mxu0 0
      %895 = vmatprep.subr.bf16.mxu0 0
      %896 = vmatpush1.bf16.msra.mxu0 0
      %897 = vmatprep.subr.bf16.mxu0 0
      %898 = vmatpush1.bf16.msra.mxu0 0
      %899 = vmatprep.subr.bf16.mxu0 0
      %900 = vmatpush1.bf16.msra.mxu0 0
      %901 = vmatprep.subr.bf16.mxu0 0
      %902 = vmatpush1.bf16.msra.mxu0 0
      %903 = vmatprep.subr.bf16.mxu0 0
      %904 = vmatpush1.bf16.msra.mxu0 0
      %905 = vmatprep.subr.bf16.mxu0 0
      %906 = vmatpush1.bf16.msra.mxu0 0
      %907 = vmatprep.subr.bf16.mxu0 0
      %908 = vmatpush1.bf16.msra.mxu0 0
      %909 = vmatprep.subr.bf16.mxu0 0
      %910 = vmatpush1.bf16.msra.mxu0 0
      %911 = vmatprep.mubr.bf16.mxu0 0
      %912 = vmatmul.mubr.bf16.gmra.mrb[0].mxu0 %v877
      %v913 = vpop.f32.mrb[0].mxu0
      %v914 = vadd.f32 %v848, %v913
      %v915 = vpop.f32.mrb[0].mxu0
      %v916 = vadd.f32 %v852, %v915
      %v917 = vpop.f32.mrb[0].mxu0
      %v918 = vpop.f32.mrb[0].mxu0
      %919 = vdwg.mxu0
      %v920 = vmax.f32 %v914, 0.0
      %v921 = vmax.f32 %v916, 0.0
      %v922 = vpack.c.bf16 %v920, %v920
      %v923 = vpack.c.bf16 %v921, %v921
      %v924 = vld [vmem:[%s773] sm:$0xf]
      %v925 = vld [vmem:[%s773 + $0x4] sm:$0xf]
      %v926 = vld [vmem:[%s773 + $0x8] sm:$0xf]
      %v927 = vld [vmem:[%s773 + $0xc] sm:$0xf]
      %v928 = vld [vmem:[%s773 + $0x10] sm:$0xf]
      %v929 = vld [vmem:[%s773 + $0x14] sm:$0xf]
      %v930 = vld [vmem:[%s773 + $0x18] sm:$0xf]
      %v931 = vld [vmem:[%s773 + $0x1c] sm:$0xf]
      %v932 = vld [vmem:[%s776] sm:$0x1]
      %v934 = vlaneseq
      %v935 = vshrl.u32 %v934, 7
      %v936 = vsub.s32 0, %v935
      %v937 = vrot.slane %v932, %v936
      %941 = vrot.lane.b32.xlu0 %v922, 32
      %v942 = vpop.permute.xlu0 %941
      %943 = vrot.lane.b32.xlu0 %v923, 32
      %v944 = vpop.permute.xlu0 %943
      %vm945 = vcmask 261120
      %v946 = vsel %vm945, %v942, %v944
      %v955 = vunpack.c.l.b16 %v924
      %v956 = vunpack.c.l.b16 %v925
      %v957 = vunpack.c.l.b16 %v926
      %v958 = vunpack.c.l.b16 %v927
      %v959 = vunpack.c.l.b16 %v928
      %v960 = vunpack.c.l.b16 %v929
      %v961 = vunpack.c.l.b16 %v930
      %v962 = vunpack.c.l.b16 %v931
      %v963 = vpack.c.b16 %v956, %v955
      %v964 = vpack.c.b16 %v958, %v957
      %v965 = vpack.c.b16 %v960, %v959
      %v966 = vpack.c.b16 %v962, %v961
      %vm971 = vcmask 523264
      %v973 = vsel %vm971, %v946, 0
      %975 = vmatprep.subr.bf16.mxu0 0
      %976 = vmatpush1.bf16.msra.mxu0 %v963
      %977 = vmatprep.subr.bf16.mxu0 0
      %978 = vmatpush1.bf16.msra.mxu0 %v964
      %979 = vmatprep.subr.bf16.mxu0 0
      %980 = vmatpush1.bf16.msra.mxu0 %v965
      %981 = vmatprep.subr.bf16.mxu0 0
      %982 = vmatpush1.bf16.msra.mxu0 %v966
      %983 = vmatprep.subr.bf16.mxu0 0
      %984 = vmatpush1.bf16.msra.mxu0 0
      %985 = vmatprep.subr.bf16.mxu0 0
      %986 = vmatpush1.bf16.msra.mxu0 0
      %987 = vmatprep.subr.bf16.mxu0 0
      %988 = vmatpush1.bf16.msra.mxu0 0
      %989 = vmatprep.subr.bf16.mxu0 0
      %990 = vmatpush1.bf16.msra.mxu0 0
      %991 = vmatprep.subr.bf16.mxu0 0
      %992 = vmatpush1.bf16.msra.mxu0 0
      %993 = vmatprep.subr.bf16.mxu0 0
      %994 = vmatpush1.bf16.msra.mxu0 0
      %995 = vmatprep.subr.bf16.mxu0 0
      %996 = vmatpush1.bf16.msra.mxu0 0
      %997 = vmatprep.subr.bf16.mxu0 0
      %998 = vmatpush1.bf16.msra.mxu0 0
      %999 = vmatprep.subr.bf16.mxu0 0
      %1000 = vmatpush1.bf16.msra.mxu0 0
      %1001 = vmatprep.subr.bf16.mxu0 0
      %1002 = vmatpush1.bf16.msra.mxu0 0
      %1003 = vmatprep.subr.bf16.mxu0 0
      %1004 = vmatpush1.bf16.msra.mxu0 0
      %1005 = vmatprep.subr.bf16.mxu0 0
      %1006 = vmatpush1.bf16.msra.mxu0 0
      %1007 = vmatprep.mubr.bf16.mxu0 0
      %1008 = vmatmul.mubr.bf16.gmra.mrb[0].mxu0 %v973
      %v1009 = vpop.f32.mrb[0].mxu0
      %v1010 = vadd.f32 %v937, %v1009
      %v1011 = vpop.f32.mrb[0].mxu0
      %v1012 = vpop.f32.mrb[0].mxu0
      %v1013 = vpop.f32.mrb[0].mxu0
      %1014 = vdwg.mxu0
      %1016 = vrot.lane.b32.xlu0 %v914, 120
      %v1017 = vpop.permute.xlu0 %1016
      %1019 = vrot.lane.b32.xlu0 %v914, 112
      %v1020 = vpop.permute.xlu0 %1019
      %1022 = vrot.lane.b32.xlu0 %v914, 104
      %v1023 = vpop.permute.xlu0 %1022
      %v1025 = vpack.c.bf16 %v914, %v914
      %v1026 = vpack.c.bf16 %v1017, %v1017
      %v1027 = vpack.c.bf16 %v1020, %v1020
      %v1028 = vpack.c.bf16 %v1023, %v1023
      %1030 = vrot.lane.b32.xlu0 %v1025, 96
      %v1031 = vpop.permute.xlu0 %1030
      %vm1032 = vcmask 64512
      %v1034 = vsel %vm1032, %v1025, 0
      %v1037 = vsel %vm1032, %v1031, 0
      %1039 = vmatprep.subr.bf16.mxu0 0
      %1040 = vmatpush1.bf16.xpose.msra.mxu0 %v1037
      %1041 = vmatprep.subr.bf16.mxu0 0
      %1042 = vmatpush1.bf16.xpose.msra.mxu0 0
      %1043 = vmatprep.subr.bf16.mxu0 0
      %1044 = vmatpush1.bf16.xpose.msra.mxu0 0
      %1045 = vmatprep.subr.bf16.mxu0 0
      %1046 = vmatpush1.bf16.xpose.msra.mxu0 0
      %1047 = vmatprep.subr.bf16.mxu0 0
      %1048 = vmatpush1.bf16.xpose.msra.mxu0 0
      %1049 = vmatprep.subr.bf16.mxu0 0
      %1050 = vmatpush1.bf16.xpose.msra.mxu0 0
      %1051 = vmatprep.subr.bf16.mxu0 0
      %1052 = vmatpush1.bf16.xpose.msra.mxu0 0
      %1053 = vmatprep.subr.bf16.mxu0 0
      %1054 = vmatpush1.bf16.xpose.msra.mxu0 0
      %1055 = vmatprep.subr.bf16.mxu0 0
      %1056 = vmatpush1.bf16.xpose.msra.mxu0 0
      %1057 = vmatprep.subr.bf16.mxu0 0
      %1058 = vmatpush1.bf16.xpose.msra.mxu0 0
      %1059 = vmatprep.subr.bf16.mxu0 0
      %1060 = vmatpush1.bf16.xpose.msra.mxu0 0
      %1061 = vmatprep.subr.bf16.mxu0 0
      %1062 = vmatpush1.bf16.xpose.msra.mxu0 0
      %1063 = vmatprep.subr.bf16.mxu0 0
      %1064 = vmatpush1.bf16.xpose.msra.mxu0 0
      %1065 = vmatprep.subr.bf16.mxu0 0
      %1066 = vmatpush1.bf16.xpose.msra.mxu0 0
      %1067 = vmatprep.subr.bf16.mxu0 0
      %1068 = vmatpush1.bf16.xpose.msra.mxu0 0
      %1069 = vmatprep.subr.bf16.mxu0 0
      %1070 = vmatpush1.bf16.xpose.msra.mxu0 0
      %1071 = vmatprep.mubr.bf16.mxu0 0
      %1072 = vmatmul.mubr.bf16.gmra.mrb[0].mxu0 %v1034
      %v1073 = vpop.f32.mrb[0].mxu0
      %v1074 = vadd.f32 0.0, %v1073
      %v1075 = vpop.f32.mrb[0].mxu0
      %v1076 = vpop.f32.mrb[0].mxu0
      %v1077 = vpop.f32.mrb[0].mxu0
      %1078 = vdwg.mxu0
      %1080 = vrot.lane.b32.xlu0 %v1026, 96
      %v1081 = vpop.permute.xlu0 %1080
      %v1083 = vsel %vm1032, %v1026, 0
      %v1086 = vsel %vm1032, %v1081, 0
      %1088 = vmatprep.subr.bf16.mxu0 0
      %1089 = vmatpush1.bf16.xpose.msra.mxu0 %v1086
      %1090 = vmatprep.subr.bf16.mxu0 0
      %1091 = vmatpush1.bf16.xpose.msra.mxu0 0
      %1092 = vmatprep.subr.bf16.mxu0 0
      %1093 = vmatpush1.bf16.xpose.msra.mxu0 0
      %1094 = vmatprep.subr.bf16.mxu0 0
      %1095 = vmatpush1.bf16.xpose.msra.mxu0 0
      %1096 = vmatprep.subr.bf16.mxu0 0
      %1097 = vmatpush1.bf16.xpose.msra.mxu0 0
      %1098 = vmatprep.subr.bf16.mxu0 0
      %1099 = vmatpush1.bf16.xpose.msra.mxu0 0
      %1100 = vmatprep.subr.bf16.mxu0 0
      %1101 = vmatpush1.bf16.xpose.msra.mxu0 0
      %1102 = vmatprep.subr.bf16.mxu0 0
      %1103 = vmatpush1.bf16.xpose.msra.mxu0 0
      %1104 = vmatprep.subr.bf16.mxu0 0
      %1105 = vmatpush1.bf16.xpose.msra.mxu0 0
      %1106 = vmatprep.subr.bf16.mxu0 0
      %1107 = vmatpush1.bf16.xpose.msra.mxu0 0
      %1108 = vmatprep.subr.bf16.mxu0 0
      %1109 = vmatpush1.bf16.xpose.msra.mxu0 0
      %1110 = vmatprep.subr.bf16.mxu0 0
      %1111 = vmatpush1.bf16.xpose.msra.mxu0 0
      %1112 = vmatprep.subr.bf16.mxu0 0
      %1113 = vmatpush1.bf16.xpose.msra.mxu0 0
      %1114 = vmatprep.subr.bf16.mxu0 0
      %1115 = vmatpush1.bf16.xpose.msra.mxu0 0
      %1116 = vmatprep.subr.bf16.mxu0 0
      %1117 = vmatpush1.bf16.xpose.msra.mxu0 0
      %1118 = vmatprep.subr.bf16.mxu0 0
      %1119 = vmatpush1.bf16.xpose.msra.mxu0 0
      %1120 = vmatprep.mubr.bf16.mxu0 0
      %1121 = vmatmul.mubr.bf16.gmra.mrb[0].mxu0 %v1083
      %v1122 = vpop.f32.mrb[0].mxu0
      %v1123 = vadd.f32 0.0, %v1122
      %v1124 = vpop.f32.mrb[0].mxu0
      %v1125 = vpop.f32.mrb[0].mxu0
      %v1126 = vpop.f32.mrb[0].mxu0
      %1127 = vdwg.mxu0
      %1129 = vrot.lane.b32.xlu0 %v1027, 96
      %v1130 = vpop.permute.xlu0 %1129
      %v1132 = vsel %vm1032, %v1027, 0
      %v1135 = vsel %vm1032, %v1130, 0
      %1137 = vmatprep.subr.bf16.mxu0 0
      %1138 = vmatpush1.bf16.xpose.msra.mxu0 %v1135
      %1139 = vmatprep.subr.bf16.mxu0 0
      %1140 = vmatpush1.bf16.xpose.msra.mxu0 0
      %1141 = vmatprep.subr.bf16.mxu0 0
      %1142 = vmatpush1.bf16.xpose.msra.mxu0 0
      %1143 = vmatprep.subr.bf16.mxu0 0
      %1144 = vmatpush1.bf16.xpose.msra.mxu0 0
      %1145 = vmatprep.subr.bf16.mxu0 0
      %1146 = vmatpush1.bf16.xpose.msra.mxu0 0
      %1147 = vmatprep.subr.bf16.mxu0 0
      %1148 = vmatpush1.bf16.xpose.msra.mxu0 0
      %1149 = vmatprep.subr.bf16.mxu0 0
      %1150 = vmatpush1.bf16.xpose.msra.mxu0 0
      %1151 = vmatprep.subr.bf16.mxu0 0
      %1152 = vmatpush1.bf16.xpose.msra.mxu0 0
      %1153 = vmatprep.subr.bf16.mxu0 0
      %1154 = vmatpush1.bf16.xpose.msra.mxu0 0
      %1155 = vmatprep.subr.bf16.mxu0 0
      %1156 = vmatpush1.bf16.xpose.msra.mxu0 0
      %1157 = vmatprep.subr.bf16.mxu0 0
      %1158 = vmatpush1.bf16.xpose.msra.mxu0 0
      %1159 = vmatprep.subr.bf16.mxu0 0
      %1160 = vmatpush1.bf16.xpose.msra.mxu0 0
      %1161 = vmatprep.subr.bf16.mxu0 0
      %1162 = vmatpush1.bf16.xpose.msra.mxu0 0
      %1163 = vmatprep.subr.bf16.mxu0 0
      %1164 = vmatpush1.bf16.xpose.msra.mxu0 0
      %1165 = vmatprep.subr.bf16.mxu0 0
      %1166 = vmatpush1.bf16.xpose.msra.mxu0 0
      %1167 = vmatprep.subr.bf16.mxu0 0
      %1168 = vmatpush1.bf16.xpose.msra.mxu0 0
      %1169 = vmatprep.mubr.bf16.mxu0 0
      %1170 = vmatmul.mubr.bf16.gmra.mrb[0].mxu0 %v1132
      %v1171 = vpop.f32.mrb[0].mxu0
      %v1172 = vadd.f32 0.0, %v1171
      %v1173 = vpop.f32.mrb[0].mxu0
      %v1174 = vpop.f32.mrb[0].mxu0
      %v1175 = vpop.f32.mrb[0].mxu0
      %1176 = vdwg.mxu0
      %1178 = vrot.lane.b32.xlu0 %v1028, 96
      %v1179 = vpop.permute.xlu0 %1178
      %v1181 = vsel %vm1032, %v1028, 0
      %v1184 = vsel %vm1032, %v1179, 0
      %1186 = vmatprep.subr.bf16.mxu0 0
      %1187 = vmatpush1.bf16.xpose.msra.mxu0 %v1184
      %1188 = vmatprep.subr.bf16.mxu0 0
      %1189 = vmatpush1.bf16.xpose.msra.mxu0 0
      %1190 = vmatprep.subr.bf16.mxu0 0
      %1191 = vmatpush1.bf16.xpose.msra.mxu0 0
      %1192 = vmatprep.subr.bf16.mxu0 0
      %1193 = vmatpush1.bf16.xpose.msra.mxu0 0
      %1194 = vmatprep.subr.bf16.mxu0 0
      %1195 = vmatpush1.bf16.xpose.msra.mxu0 0
      %1196 = vmatprep.subr.bf16.mxu0 0
      %1197 = vmatpush1.bf16.xpose.msra.mxu0 0
      %1198 = vmatprep.subr.bf16.mxu0 0
      %1199 = vmatpush1.bf16.xpose.msra.mxu0 0
      %1200 = vmatprep.subr.bf16.mxu0 0
      %1201 = vmatpush1.bf16.xpose.msra.mxu0 0
      %1202 = vmatprep.subr.bf16.mxu0 0
      %1203 = vmatpush1.bf16.xpose.msra.mxu0 0
      %1204 = vmatprep.subr.bf16.mxu0 0
      %1205 = vmatpush1.bf16.xpose.msra.mxu0 0
      %1206 = vmatprep.subr.bf16.mxu0 0
      %1207 = vmatpush1.bf16.xpose.msra.mxu0 0
      %1208 = vmatprep.subr.bf16.mxu0 0
      %1209 = vmatpush1.bf16.xpose.msra.mxu0 0
      %1210 = vmatprep.subr.bf16.mxu0 0
      %1211 = vmatpush1.bf16.xpose.msra.mxu0 0
      %1212 = vmatprep.subr.bf16.mxu0 0
      %1213 = vmatpush1.bf16.xpose.msra.mxu0 0
      %1214 = vmatprep.subr.bf16.mxu0 0
      %1215 = vmatpush1.bf16.xpose.msra.mxu0 0
      %1216 = vmatprep.subr.bf16.mxu0 0
      %1217 = vmatpush1.bf16.xpose.msra.mxu0 0
      %1218 = vmatprep.mubr.bf16.mxu0 0
      %1219 = vmatmul.mubr.bf16.gmra.mrb[0].mxu0 %v1181
      %v1220 = vpop.f32.mrb[0].mxu0
      %v1221 = vadd.f32 0.0, %v1220
      %v1222 = vpop.f32.mrb[0].mxu0
      %v1223 = vpop.f32.mrb[0].mxu0
      %v1224 = vpop.f32.mrb[0].mxu0
      %1225 = vdwg.mxu0
      %v1226 = vsel %vm1032, %v1074, -inf
      %1227 = vmax.xlane.f32.xlu0 %v1226
      %v1228 = vpop.xlane.xlu0 %1227
      %v1229 = vsel %vm1032, %v1123, -inf
      %1230 = vmax.xlane.f32.xlu0 %v1229
      %v1231 = vpop.xlane.xlu0 %1230
      %v1232 = vsel %vm1032, %v1172, -inf
      %1233 = vmax.xlane.f32.xlu0 %v1232
      %v1234 = vpop.xlane.xlu0 %1233
      %v1235 = vsel %vm1032, %v1221, -inf
      %1236 = vmax.xlane.f32.xlu0 %v1235
      %v1237 = vpop.xlane.xlu0 %1236
      %v1238 = vsub.f32 %v1074, %v1228
      %v1239 = vsub.f32 %v1123, %v1231
      %v1240 = vsub.f32 %v1172, %v1234
      %v1241 = vsub.f32 %v1221, %v1237
      %v1242 = vmul.f32 %v1238, 1.442695
      %v1243 = vpow.pop %v1242
      %v1244 = vmul.f32 %v1239, 1.442695
      %v1245 = vpow.pop %v1244
      %v1246 = vmul.f32 %v1240, 1.442695
      %v1247 = vpow.pop %v1246
      %v1248 = vmul.f32 %v1241, 1.442695
      %v1249 = vpow.pop %v1248
      %v1250 = vsel %vm1032, %v1243, 0.0
      %1251 = vadd.xlane.f32.xlu0 %v1250
      %v1252 = vpop.xlane.xlu0 %1251
      %v1253 = vsel %vm1032, %v1245, 0.0
      %1254 = vadd.xlane.f32.xlu0 %v1253
      %v1255 = vpop.xlane.xlu0 %1254
      %v1256 = vsel %vm1032, %v1247, 0.0
      %1257 = vadd.xlane.f32.xlu0 %v1256
      %v1258 = vpop.xlane.xlu0 %1257
      %v1259 = vsel %vm1032, %v1249, 0.0
      %1260 = vadd.xlane.f32.xlu0 %v1259
      %v1261 = vpop.xlane.xlu0 %1260
      %v1262 = vrcp.pop %v1252
      %v1263 = vrcp.pop %v1255
      %v1264 = vrcp.pop %v1258
      %v1265 = vrcp.pop %v1261
      %v1266 = vmul.f32 %v1243, %v1262
      %v1267 = vmul.f32 %v1245, %v1263
      %v1268 = vmul.f32 %v1247, %v1264
      %v1269 = vmul.f32 %v1249, %v1265
      %v1270 = vpack.c.bf16 %v1266, %v1266
      %v1271 = vpack.c.bf16 %v1267, %v1267
      %v1272 = vpack.c.bf16 %v1268, %v1268
      %v1273 = vpack.c.bf16 %v1269, %v1269
      %1274 = vrot.lane.b32.xlu0 %v1025, 64
      %v1275 = vpop.permute.xlu0 %1274
      %v1277 = vsel %vm1032, %v1270, 0
      %vm1279 = vcmask 1043456
      %v1281 = vsel %vm1279, %v1275, 0
      %1283 = vmatprep.subr.bf16.mxu0 0
      %1284 = vmatpush1.bf16.msra.mxu0 %v1281
      %1285 = vmatprep.subr.bf16.mxu0 0
      %1286 = vmatpush1.bf16.msra.mxu0 0
      %1287 = vmatprep.subr.bf16.mxu0 0
      %1288 = vmatpush1.bf16.msra.mxu0 0
      %1289 = vmatprep.subr.bf16.mxu0 0
      %1290 = vmatpush1.bf16.msra.mxu0 0
      %1291 = vmatprep.subr.bf16.mxu0 0
      %1292 = vmatpush1.bf16.msra.mxu0 0
      %1293 = vmatprep.subr.bf16.mxu0 0
      %1294 = vmatpush1.bf16.msra.mxu0 0
      %1295 = vmatprep.subr.bf16.mxu0 0
      %1296 = vmatpush1.bf16.msra.mxu0 0
      %1297 = vmatprep.subr.bf16.mxu0 0
      %1298 = vmatpush1.bf16.msra.mxu0 0
      %1299 = vmatprep.subr.bf16.mxu0 0
      %1300 = vmatpush1.bf16.msra.mxu0 0
      %1301 = vmatprep.subr.bf16.mxu0 0
      %1302 = vmatpush1.bf16.msra.mxu0 0
      %1303 = vmatprep.subr.bf16.mxu0 0
      %1304 = vmatpush1.bf16.msra.mxu0 0
      %1305 = vmatprep.subr.bf16.mxu0 0
      %1306 = vmatpush1.bf16.msra.mxu0 0
      %1307 = vmatprep.subr.bf16.mxu0 0
      %1308 = vmatpush1.bf16.msra.mxu0 0
      %1309 = vmatprep.subr.bf16.mxu0 0
      %1310 = vmatpush1.bf16.msra.mxu0 0
      %1311 = vmatprep.subr.bf16.mxu0 0
      %1312 = vmatpush1.bf16.msra.mxu0 0
      %1313 = vmatprep.subr.bf16.mxu0 0
      %1314 = vmatpush1.bf16.msra.mxu0 0
      %1315 = vmatprep.mubr.bf16.mxu0 0
      %1316 = vmatmul.mubr.bf16.gmra.mrb[0].mxu0 %v1277
      %v1317 = vpop.f32.mrb[0].mxu0
      %v1318 = vadd.f32 0.0, %v1317
      %v1319 = vpop.f32.mrb[0].mxu0
      %v1320 = vpop.f32.mrb[0].mxu0
      %v1321 = vpop.f32.mrb[0].mxu0
      %1322 = vdwg.mxu0
      %1323 = vrot.lane.b32.xlu0 %v1026, 64
      %v1324 = vpop.permute.xlu0 %1323
      %v1326 = vsel %vm1032, %v1271, 0
      %v1329 = vsel %vm1279, %v1324, 0
      %1331 = vmatprep.subr.bf16.mxu0 0
      %1332 = vmatpush1.bf16.msra.mxu0 %v1329
      %1333 = vmatprep.subr.bf16.mxu0 0
      %1334 = vmatpush1.bf16.msra.mxu0 0
      %1335 = vmatprep.subr.bf16.mxu0 0
      %1336 = vmatpush1.bf16.msra.mxu0 0
      %1337 = vmatprep.subr.bf16.mxu0 0
      %1338 = vmatpush1.bf16.msra.mxu0 0
      %1339 = vmatprep.subr.bf16.mxu0 0
      %1340 = vmatpush1.bf16.msra.mxu0 0
      %1341 = vmatprep.subr.bf16.mxu0 0
      %1342 = vmatpush1.bf16.msra.mxu0 0
      %1343 = vmatprep.subr.bf16.mxu0 0
      %1344 = vmatpush1.bf16.msra.mxu0 0
      %1345 = vmatprep.subr.bf16.mxu0 0
      %1346 = vmatpush1.bf16.msra.mxu0 0
      %1347 = vmatprep.subr.bf16.mxu0 0
      %1348 = vmatpush1.bf16.msra.mxu0 0
      %1349 = vmatprep.subr.bf16.mxu0 0
      %1350 = vmatpush1.bf16.msra.mxu0 0
      %1351 = vmatprep.subr.bf16.mxu0 0
      %1352 = vmatpush1.bf16.msra.mxu0 0
      %1353 = vmatprep.subr.bf16.mxu0 0
      %1354 = vmatpush1.bf16.msra.mxu0 0
      %1355 = vmatprep.subr.bf16.mxu0 0
      %1356 = vmatpush1.bf16.msra.mxu0 0
      %1357 = vmatprep.subr.bf16.mxu0 0
      %1358 = vmatpush1.bf16.msra.mxu0 0
      %1359 = vmatprep.subr.bf16.mxu0 0
      %1360 = vmatpush1.bf16.msra.mxu0 0
      %1361 = vmatprep.subr.bf16.mxu0 0
      %1362 = vmatpush1.bf16.msra.mxu0 0
      %1363 = vmatprep.mubr.bf16.mxu0 0
      %1364 = vmatmul.mubr.bf16.gmra.mrb[0].mxu0 %v1326
      %v1365 = vpop.f32.mrb[0].mxu0
      %v1366 = vadd.f32 0.0, %v1365
      %v1367 = vpop.f32.mrb[0].mxu0
      %v1368 = vpop.f32.mrb[0].mxu0
      %v1369 = vpop.f32.mrb[0].mxu0
      %1370 = vdwg.mxu0
      %1371 = vrot.lane.b32.xlu0 %v1027, 64
      %v1372 = vpop.permute.xlu0 %1371
      %v1374 = vsel %vm1032, %v1272, 0
      %v1377 = vsel %vm1279, %v1372, 0
      %1379 = vmatprep.subr.bf16.mxu0 0
      %1380 = vmatpush1.bf16.msra.mxu0 %v1377
      %1381 = vmatprep.subr.bf16.mxu0 0
      %1382 = vmatpush1.bf16.msra.mxu0 0
      %1383 = vmatprep.subr.bf16.mxu0 0
      %1384 = vmatpush1.bf16.msra.mxu0 0
      %1385 = vmatprep.subr.bf16.mxu0 0
      %1386 = vmatpush1.bf16.msra.mxu0 0
      %1387 = vmatprep.subr.bf16.mxu0 0
      %1388 = vmatpush1.bf16.msra.mxu0 0
      %1389 = vmatprep.subr.bf16.mxu0 0
      %1390 = vmatpush1.bf16.msra.mxu0 0
      %1391 = vmatprep.subr.bf16.mxu0 0
      %1392 = vmatpush1.bf16.msra.mxu0 0
      %1393 = vmatprep.subr.bf16.mxu0 0
      %1394 = vmatpush1.bf16.msra.mxu0 0
      %1395 = vmatprep.subr.bf16.mxu0 0
      %1396 = vmatpush1.bf16.msra.mxu0 0
      %1397 = vmatprep.subr.bf16.mxu0 0
      %1398 = vmatpush1.bf16.msra.mxu0 0
      %1399 = vmatprep.subr.bf16.mxu0 0
      %1400 = vmatpush1.bf16.msra.mxu0 0
      %1401 = vmatprep.subr.bf16.mxu0 0
      %1402 = vmatpush1.bf16.msra.mxu0 0
      %1403 = vmatprep.subr.bf16.mxu0 0
      %1404 = vmatpush1.bf16.msra.mxu0 0
      %1405 = vmatprep.subr.bf16.mxu0 0
      %1406 = vmatpush1.bf16.msra.mxu0 0
      %1407 = vmatprep.subr.bf16.mxu0 0
      %1408 = vmatpush1.bf16.msra.mxu0 0
      %1409 = vmatprep.subr.bf16.mxu0 0
      %1410 = vmatpush1.bf16.msra.mxu0 0
      %1411 = vmatprep.mubr.bf16.mxu0 0
      %1412 = vmatmul.mubr.bf16.gmra.mrb[0].mxu0 %v1374
      %v1413 = vpop.f32.mrb[0].mxu0
      %v1414 = vadd.f32 0.0, %v1413
      %v1415 = vpop.f32.mrb[0].mxu0
      %v1416 = vpop.f32.mrb[0].mxu0
      %v1417 = vpop.f32.mrb[0].mxu0
      %1418 = vdwg.mxu0
      %1419 = vrot.lane.b32.xlu0 %v1028, 64
      %v1420 = vpop.permute.xlu0 %1419
      %v1422 = vsel %vm1032, %v1273, 0
      %v1425 = vsel %vm1279, %v1420, 0
      %1427 = vmatprep.subr.bf16.mxu0 0
      %1428 = vmatpush1.bf16.msra.mxu0 %v1425
      %1429 = vmatprep.subr.bf16.mxu0 0
      %1430 = vmatpush1.bf16.msra.mxu0 0
      %1431 = vmatprep.subr.bf16.mxu0 0
      %1432 = vmatpush1.bf16.msra.mxu0 0
      %1433 = vmatprep.subr.bf16.mxu0 0
      %1434 = vmatpush1.bf16.msra.mxu0 0
      %1435 = vmatprep.subr.bf16.mxu0 0
      %1436 = vmatpush1.bf16.msra.mxu0 0
      %1437 = vmatprep.subr.bf16.mxu0 0
      %1438 = vmatpush1.bf16.msra.mxu0 0
      %1439 = vmatprep.subr.bf16.mxu0 0
      %1440 = vmatpush1.bf16.msra.mxu0 0
      %1441 = vmatprep.subr.bf16.mxu0 0
      %1442 = vmatpush1.bf16.msra.mxu0 0
      %1443 = vmatprep.subr.bf16.mxu0 0
      %1444 = vmatpush1.bf16.msra.mxu0 0
      %1445 = vmatprep.subr.bf16.mxu0 0
      %1446 = vmatpush1.bf16.msra.mxu0 0
      %1447 = vmatprep.subr.bf16.mxu0 0
      %1448 = vmatpush1.bf16.msra.mxu0 0
      %1449 = vmatprep.subr.bf16.mxu0 0
      %1450 = vmatpush1.bf16.msra.mxu0 0
      %1451 = vmatprep.subr.bf16.mxu0 0
      %1452 = vmatpush1.bf16.msra.mxu0 0
      %1453 = vmatprep.subr.bf16.mxu0 0
      %1454 = vmatpush1.bf16.msra.mxu0 0
      %1455 = vmatprep.subr.bf16.mxu0 0
      %1456 = vmatpush1.bf16.msra.mxu0 0
      %1457 = vmatprep.subr.bf16.mxu0 0
      %1458 = vmatpush1.bf16.msra.mxu0 0
      %1459 = vmatprep.mubr.bf16.mxu0 0
      %1460 = vmatmul.mubr.bf16.gmra.mrb[0].mxu0 %v1422
      %v1461 = vpop.f32.mrb[0].mxu0
      %v1462 = vadd.f32 0.0, %v1461
      %v1463 = vpop.f32.mrb[0].mxu0
      %v1464 = vpop.f32.mrb[0].mxu0
      %v1465 = vpop.f32.mrb[0].mxu0
      %1466 = vdwg.mxu0
      %v1467 = vpack.c.bf16 %v1318, %v1318
      %v1468 = vpack.c.bf16 %v1366, %v1366
      %v1469 = vpack.c.bf16 %v1414, %v1414
      %v1470 = vpack.c.bf16 %v1462, %v1462
      %v1471 = vld [vmem:[%s781] sm:$0xf]
      %v1472 = vld [vmem:[%s781 + $0x4] sm:$0xf]
      %v1473 = vld [vmem:[%s781 + $0x8] sm:$0xf]
      %v1474 = vld [vmem:[%s781 + $0xc] sm:$0xf]
      %v1476 = vsel %vm1032, %v1467, 0
      %v1479 = vsel %vm1279, %v1471, 0
      %1481 = vmatprep.subr.bf16.mxu0 0
      %1482 = vmatpush1.bf16.msra.mxu0 %v1479
      %1483 = vmatprep.subr.bf16.mxu0 0
      %1484 = vmatpush1.bf16.msra.mxu0 0
      %1485 = vmatprep.subr.bf16.mxu0 0
      %1486 = vmatpush1.bf16.msra.mxu0 0
      %1487 = vmatprep.subr.bf16.mxu0 0
      %1488 = vmatpush1.bf16.msra.mxu0 0
      %1489 = vmatprep.subr.bf16.mxu0 0
      %1490 = vmatpush1.bf16.msra.mxu0 0
      %1491 = vmatprep.subr.bf16.mxu0 0
      %1492 = vmatpush1.bf16.msra.mxu0 0
      %1493 = vmatprep.subr.bf16.mxu0 0
      %1494 = vmatpush1.bf16.msra.mxu0 0
      %1495 = vmatprep.subr.bf16.mxu0 0
      %1496 = vmatpush1.bf16.msra.mxu0 0
      %1497 = vmatprep.subr.bf16.mxu0 0
      %1498 = vmatpush1.bf16.msra.mxu0 0
      %1499 = vmatprep.subr.bf16.mxu0 0
      %1500 = vmatpush1.bf16.msra.mxu0 0
      %1501 = vmatprep.subr.bf16.mxu0 0
      %1502 = vmatpush1.bf16.msra.mxu0 0
      %1503 = vmatprep.subr.bf16.mxu0 0
      %1504 = vmatpush1.bf16.msra.mxu0 0
      %1505 = vmatprep.subr.bf16.mxu0 0
      %1506 = vmatpush1.bf16.msra.mxu0 0
      %1507 = vmatprep.subr.bf16.mxu0 0
      %1508 = vmatpush1.bf16.msra.mxu0 0
      %1509 = vmatprep.subr.bf16.mxu0 0
      %1510 = vmatpush1.bf16.msra.mxu0 0
      %1511 = vmatprep.subr.bf16.mxu0 0
      %1512 = vmatpush1.bf16.msra.mxu0 0
      %1513 = vmatprep.mubr.bf16.mxu0 0
      %1514 = vmatmul.mubr.bf16.gmra.mrb[0].mxu0 %v1476
      %v1515 = vpop.f32.mrb[0].mxu0
      %v1516 = vadd.f32 0.0, %v1515
      %v1517 = vpop.f32.mrb[0].mxu0
      %v1518 = vpop.f32.mrb[0].mxu0
      %v1519 = vpop.f32.mrb[0].mxu0
      %1520 = vdwg.mxu0
      %v1522 = vsel %vm1032, %v1468, 0
      %v1525 = vsel %vm1279, %v1472, 0
      %1527 = vmatprep.subr.bf16.mxu0 0
      %1528 = vmatpush1.bf16.msra.mxu0 %v1525
      %1529 = vmatprep.subr.bf16.mxu0 0
      %1530 = vmatpush1.bf16.msra.mxu0 0
      %1531 = vmatprep.subr.bf16.mxu0 0
      %1532 = vmatpush1.bf16.msra.mxu0 0
      %1533 = vmatprep.subr.bf16.mxu0 0
      %1534 = vmatpush1.bf16.msra.mxu0 0
      %1535 = vmatprep.subr.bf16.mxu0 0
      %1536 = vmatpush1.bf16.msra.mxu0 0
      %1537 = vmatprep.subr.bf16.mxu0 0
      %1538 = vmatpush1.bf16.msra.mxu0 0
      %1539 = vmatprep.subr.bf16.mxu0 0
      %1540 = vmatpush1.bf16.msra.mxu0 0
      %1541 = vmatprep.subr.bf16.mxu0 0
      %1542 = vmatpush1.bf16.msra.mxu0 0
      %1543 = vmatprep.subr.bf16.mxu0 0
      %1544 = vmatpush1.bf16.msra.mxu0 0
      %1545 = vmatprep.subr.bf16.mxu0 0
      %1546 = vmatpush1.bf16.msra.mxu0 0
      %1547 = vmatprep.subr.bf16.mxu0 0
      %1548 = vmatpush1.bf16.msra.mxu0 0
      %1549 = vmatprep.subr.bf16.mxu0 0
      %1550 = vmatpush1.bf16.msra.mxu0 0
      %1551 = vmatprep.subr.bf16.mxu0 0
      %1552 = vmatpush1.bf16.msra.mxu0 0
      %1553 = vmatprep.subr.bf16.mxu0 0
      %1554 = vmatpush1.bf16.msra.mxu0 0
      %1555 = vmatprep.subr.bf16.mxu0 0
      %1556 = vmatpush1.bf16.msra.mxu0 0
      %1557 = vmatprep.subr.bf16.mxu0 0
      %1558 = vmatpush1.bf16.msra.mxu0 0
      %1559 = vmatprep.mubr.bf16.mxu0 0
      %1560 = vmatmul.mubr.bf16.gmra.mrb[0].mxu0 %v1522
      %v1561 = vpop.f32.mrb[0].mxu0
      %v1562 = vadd.f32 0.0, %v1561
      %v1563 = vpop.f32.mrb[0].mxu0
      %v1564 = vpop.f32.mrb[0].mxu0
      %v1565 = vpop.f32.mrb[0].mxu0
      %1566 = vdwg.mxu0
      %v1568 = vsel %vm1032, %v1469, 0
      %v1571 = vsel %vm1279, %v1473, 0
      %1573 = vmatprep.subr.bf16.mxu0 0
      %1574 = vmatpush1.bf16.msra.mxu0 %v1571
      %1575 = vmatprep.subr.bf16.mxu0 0
      %1576 = vmatpush1.bf16.msra.mxu0 0
      %1577 = vmatprep.subr.bf16.mxu0 0
      %1578 = vmatpush1.bf16.msra.mxu0 0
      %1579 = vmatprep.subr.bf16.mxu0 0
      %1580 = vmatpush1.bf16.msra.mxu0 0
      %1581 = vmatprep.subr.bf16.mxu0 0
      %1582 = vmatpush1.bf16.msra.mxu0 0
      %1583 = vmatprep.subr.bf16.mxu0 0
      %1584 = vmatpush1.bf16.msra.mxu0 0
      %1585 = vmatprep.subr.bf16.mxu0 0
      %1586 = vmatpush1.bf16.msra.mxu0 0
      %1587 = vmatprep.subr.bf16.mxu0 0
      %1588 = vmatpush1.bf16.msra.mxu0 0
      %1589 = vmatprep.subr.bf16.mxu0 0
      %1590 = vmatpush1.bf16.msra.mxu0 0
      %1591 = vmatprep.subr.bf16.mxu0 0
      %1592 = vmatpush1.bf16.msra.mxu0 0
      %1593 = vmatprep.subr.bf16.mxu0 0
      %1594 = vmatpush1.bf16.msra.mxu0 0
      %1595 = vmatprep.subr.bf16.mxu0 0
      %1596 = vmatpush1.bf16.msra.mxu0 0
      %1597 = vmatprep.subr.bf16.mxu0 0
      %1598 = vmatpush1.bf16.msra.mxu0 0
      %1599 = vmatprep.subr.bf16.mxu0 0
      %1600 = vmatpush1.bf16.msra.mxu0 0
      %1601 = vmatprep.subr.bf16.mxu0 0
      %1602 = vmatpush1.bf16.msra.mxu0 0
      %1603 = vmatprep.subr.bf16.mxu0 0
      %1604 = vmatpush1.bf16.msra.mxu0 0
      %1605 = vmatprep.mubr.bf16.mxu0 0
      %1606 = vmatmul.mubr.bf16.gmra.mrb[0].mxu0 %v1568
      %v1607 = vpop.f32.mrb[0].mxu0
      %v1608 = vadd.f32 0.0, %v1607
      %v1609 = vpop.f32.mrb[0].mxu0
      %v1610 = vpop.f32.mrb[0].mxu0
      %v1611 = vpop.f32.mrb[0].mxu0
      %1612 = vdwg.mxu0
      %v1614 = vsel %vm1032, %v1470, 0
      %v1617 = vsel %vm1279, %v1474, 0
      %1619 = vmatprep.subr.bf16.mxu0 0
      %1620 = vmatpush1.bf16.msra.mxu0 %v1617
      %1621 = vmatprep.subr.bf16.mxu0 0
      %1622 = vmatpush1.bf16.msra.mxu0 0
      %1623 = vmatprep.subr.bf16.mxu0 0
      %1624 = vmatpush1.bf16.msra.mxu0 0
      %1625 = vmatprep.subr.bf16.mxu0 0
      %1626 = vmatpush1.bf16.msra.mxu0 0
      %1627 = vmatprep.subr.bf16.mxu0 0
      %1628 = vmatpush1.bf16.msra.mxu0 0
      %1629 = vmatprep.subr.bf16.mxu0 0
      %1630 = vmatpush1.bf16.msra.mxu0 0
      %1631 = vmatprep.subr.bf16.mxu0 0
      %1632 = vmatpush1.bf16.msra.mxu0 0
      %1633 = vmatprep.subr.bf16.mxu0 0
      %1634 = vmatpush1.bf16.msra.mxu0 0
      %1635 = vmatprep.subr.bf16.mxu0 0
      %1636 = vmatpush1.bf16.msra.mxu0 0
      %1637 = vmatprep.subr.bf16.mxu0 0
      %1638 = vmatpush1.bf16.msra.mxu0 0
      %1639 = vmatprep.subr.bf16.mxu0 0
      %1640 = vmatpush1.bf16.msra.mxu0 0
      %1641 = vmatprep.subr.bf16.mxu0 0
      %1642 = vmatpush1.bf16.msra.mxu0 0
      %1643 = vmatprep.subr.bf16.mxu0 0
      %1644 = vmatpush1.bf16.msra.mxu0 0
      %1645 = vmatprep.subr.bf16.mxu0 0
      %1646 = vmatpush1.bf16.msra.mxu0 0
      %1647 = vmatprep.subr.bf16.mxu0 0
      %1648 = vmatpush1.bf16.msra.mxu0 0
      %1649 = vmatprep.subr.bf16.mxu0 0
      %1650 = vmatpush1.bf16.msra.mxu0 0
      %1651 = vmatprep.mubr.bf16.mxu0 0
      %1652 = vmatmul.mubr.bf16.gmra.mrb[0].mxu0 %v1614
      %v1653 = vpop.f32.mrb[0].mxu0
      %v1654 = vadd.f32 0.0, %v1653
      %v1655 = vpop.f32.mrb[0].mxu0
      %v1656 = vpop.f32.mrb[0].mxu0
      %v1657 = vpop.f32.mrb[0].mxu0
      %1658 = vdwg.mxu0
      %v1659 = vsel %vm875, %v1516, 0.0
      %v1660 = vsel %vm875, %v1562, 0.0
      %v1661 = vadd.f32 %v1659, %v1660
      %v1662 = vsel %vm875, %v1608, 0.0
      %v1663 = vadd.f32 %v1661, %v1662
      %v1664 = vsel %vm875, %v1654, 0.0
      %v1665 = vadd.f32 %v1663, %v1664
      %v1666 = vld [vmem:[%s784] sm:$0x1]
      %v1668 = vlaneseq
      %v1669 = vshrl.u32 %v1668, 7
      %v1670 = vsub.s32 0, %v1669
      %v1671 = vrot.slane %v1666, %v1670
      %v1673 = vadd.f32 %v1665, %v1671
      %v1674 = vld [vmem:[%s787] sm:$0x1]
      %v1675 = vld [vmem:[%s790] sm:$0x1]
      %v1676 = vxor.u32 %v1010, 2147483648
      %v1677 = vmul.f32 %v1676, 1.442695
      %v1678 = vpow.pop %v1677
      %v1679 = vadd.f32 %v1678, 1.0
      %v1680 = vrcp.pop %v1679
      %v1681 = vmul.f32 1.0, %v1680
      %v1682 = vmul.f32 %v837, %v1681
      %v1683 = vsub.f32 1.0, %v1681
      %v1684 = vmul.f32 %v1673, %v1683
      %v1685 = vadd.f32 %v1682, %v1684
      %v1686 = vsel %vm875, %v1685, 0.0
      %1687 = vadd.xlane.f32.xlu0 %v1686
      %v1688 = vpop.xlane.xlu0 %1687
      %v1689 = vrcp.pop 32.0
      %v1690 = vmul.f32 %v1688, %v1689
      %v1691 = vsub.f32 %v1685, %v1690
      %v1692 = vmul.f32 %v1691, %v1691
      %v1693 = vsel %vm875, %v1692, 0.0
      %1694 = vadd.xlane.f32.xlu0 %v1693
      %v1695 = vpop.xlane.xlu0 %1694
      %v1696 = vmul.f32 %v1695, 0.032258064
      %v1697 = vrsqrt.pop %v1696
      %v1698 = vmul.f32 %v1696, %v1697
      %vm1699 = vcmp.eq.f32.partialorder %v1696, inf
      %v1700 = vsel %vm1699, %v1696, %v1698
      %vm1701 = vcmp.eq.f32.partialorder %v1696, 0.0
      %v1702 = vand.u32 %v1696, 2147483648
      %v1703 = vsel %vm1701, %v1702, %v1700
      %v1704 = vadd.f32 %v1703, 1e-06
      %v1705 = vrcp.pop %v1704
      %v1706 = vmul.f32 1.0, %v1705
      %v1707 = vmul.f32 %v1691, %v1706
      %v1709 = vlaneseq
      %v1710 = vshrl.u32 %v1709, 7
      %v1711 = vsub.s32 0, %v1710
      %v1712 = vrot.slane %v1674, %v1711
      %v1714 = vmul.f32 %v1712, %v1707
      %v1716 = vlaneseq
      %v1717 = vshrl.u32 %v1716, 7
      %v1718 = vsub.s32 0, %v1717
      %v1719 = vrot.slane %v1675, %v1718
      %v1721 = vadd.f32 %v1714, %v1719
      %v1722 = vpack.c.bf16 %v1721, %v1721
      %v1723 = vld [vmem:[%s795] sm:$0xf]
      %v1724 = vld [vmem:[%s795 + $0x4] sm:$0xf]
      %v1725 = vld [vmem:[%s795 + $0x8] sm:$0xf]
      %v1726 = vld [vmem:[%s795 + $0xc] sm:$0xf]
      %v1727 = vld [vmem:[%s798] sm:$0x1]
      %v1729 = vlaneseq
      %v1730 = vshrl.u32 %v1729, 7
      %v1731 = vsub.s32 0, %v1730
      %v1732 = vrot.slane %v1727, %v1731
      %v1738 = vunpack.c.l.b16 %v1723
      %v1739 = vunpack.c.l.b16 %v1724
      %v1740 = vunpack.c.l.b16 %v1725
      %v1741 = vunpack.c.l.b16 %v1726
      %v1742 = vpack.c.b16 %v1739, %v1738
      %v1743 = vpack.c.b16 %v1741, %v1740
      %v1747 = vsel %vm875, %v1722, 0
      %1749 = vmatprep.subr.bf16.mxu0 0
      %1750 = vmatpush1.bf16.msra.mxu0 %v1742
      %1751 = vmatprep.subr.bf16.mxu0 0
      %1752 = vmatpush1.bf16.msra.mxu0 %v1743
      %1753 = vmatprep.subr.bf16.mxu0 0
      %1754 = vmatpush1.bf16.msra.mxu0 0
      %1755 = vmatprep.subr.bf16.mxu0 0
      %1756 = vmatpush1.bf16.msra.mxu0 0
      %1757 = vmatprep.subr.bf16.mxu0 0
      %1758 = vmatpush1.bf16.msra.mxu0 0
      %1759 = vmatprep.subr.bf16.mxu0 0
      %1760 = vmatpush1.bf16.msra.mxu0 0
      %1761 = vmatprep.subr.bf16.mxu0 0
      %1762 = vmatpush1.bf16.msra.mxu0 0
      %1763 = vmatprep.subr.bf16.mxu0 0
      %1764 = vmatpush1.bf16.msra.mxu0 0
      %1765 = vmatprep.subr.bf16.mxu0 0
      %1766 = vmatpush1.bf16.msra.mxu0 0
      %1767 = vmatprep.subr.bf16.mxu0 0
      %1768 = vmatpush1.bf16.msra.mxu0 0
      %1769 = vmatprep.subr.bf16.mxu0 0
      %1770 = vmatpush1.bf16.msra.mxu0 0
      %1771 = vmatprep.subr.bf16.mxu0 0
      %1772 = vmatpush1.bf16.msra.mxu0 0
      %1773 = vmatprep.subr.bf16.mxu0 0
      %1774 = vmatpush1.bf16.msra.mxu0 0
      %1775 = vmatprep.subr.bf16.mxu0 0
      %1776 = vmatpush1.bf16.msra.mxu0 0
      %1777 = vmatprep.subr.bf16.mxu0 0
      %1778 = vmatpush1.bf16.msra.mxu0 0
      %1779 = vmatprep.subr.bf16.mxu0 0
      %1780 = vmatpush1.bf16.msra.mxu0 0
      %1781 = vmatprep.mubr.bf16.mxu0 0
      %1782 = vmatmul.mubr.bf16.gmra.mrb[0].mxu0 %v1747
      %v1783 = vpop.f32.mrb[0].mxu0
      %v1784 = vadd.f32 %v1732, %v1783
      %v1785 = vpop.f32.mrb[0].mxu0
      %v1786 = vpop.f32.mrb[0].mxu0
      %v1787 = vpop.f32.mrb[0].mxu0
      %1788 = vdwg.mxu0
      %v1789 = vmax.f32 %v1784, 0.0
      %v1790 = vpack.c.bf16 %v1789, %v1789
      %v1791 = vld [vmem:[%s803] sm:$0xf]
      %v1792 = vld [vmem:[%s803 + $0x4] sm:$0xf]
      %v1793 = vld [vmem:[%s803 + $0x8] sm:$0xf]
      %v1794 = vld [vmem:[%s803 + $0xc] sm:$0xf]
      %v1795 = vld [vmem:[%s803 + $0x10] sm:$0xf]
      %v1796 = vld [vmem:[%s803 + $0x14] sm:$0xf]
      %v1797 = vld [vmem:[%s803 + $0x18] sm:$0xf]
      %v1798 = vld [vmem:[%s803 + $0x1c] sm:$0xf]
      %v1799 = vld [vmem:[%s806] sm:$0x1]
      %v1801 = vlaneseq
      %v1802 = vshrl.u32 %v1801, 7
      %v1803 = vsub.s32 0, %v1802
      %v1804 = vrot.slane %v1799, %v1803
      %v1814 = vunpack.c.l.b16 %v1791
      %v1815 = vunpack.c.l.b16 %v1792
      %v1816 = vunpack.c.l.b16 %v1793
      %v1817 = vunpack.c.l.b16 %v1794
      %v1818 = vunpack.c.l.b16 %v1795
      %v1819 = vunpack.c.l.b16 %v1796
      %v1820 = vunpack.c.l.b16 %v1797
      %v1821 = vunpack.c.l.b16 %v1798
      %v1822 = vpack.c.b16 %v1815, %v1814
      %v1823 = vpack.c.b16 %v1817, %v1816
      %v1824 = vpack.c.b16 %v1819, %v1818
      %v1825 = vpack.c.b16 %v1821, %v1820
      %v1831 = vsel %vm971, %v1790, 0
      %1833 = vmatprep.subr.bf16.mxu0 0
      %1834 = vmatpush1.bf16.msra.mxu0 %v1822
      %1835 = vmatprep.subr.bf16.mxu0 0
      %1836 = vmatpush1.bf16.msra.mxu0 %v1823
      %1837 = vmatprep.subr.bf16.mxu0 0
      %1838 = vmatpush1.bf16.msra.mxu0 %v1824
      %1839 = vmatprep.subr.bf16.mxu0 0
      %1840 = vmatpush1.bf16.msra.mxu0 %v1825
      %1841 = vmatprep.subr.bf16.mxu0 0
      %1842 = vmatpush1.bf16.msra.mxu0 0
      %1843 = vmatprep.subr.bf16.mxu0 0
      %1844 = vmatpush1.bf16.msra.mxu0 0
      %1845 = vmatprep.subr.bf16.mxu0 0
      %1846 = vmatpush1.bf16.msra.mxu0 0
      %1847 = vmatprep.subr.bf16.mxu0 0
      %1848 = vmatpush1.bf16.msra.mxu0 0
      %1849 = vmatprep.subr.bf16.mxu0 0
      %1850 = vmatpush1.bf16.msra.mxu0 0
      %1851 = vmatprep.subr.bf16.mxu0 0
      %1852 = vmatpush1.bf16.msra.mxu0 0
      %1853 = vmatprep.subr.bf16.mxu0 0
      %1854 = vmatpush1.bf16.msra.mxu0 0
      %1855 = vmatprep.subr.bf16.mxu0 0
      %1856 = vmatpush1.bf16.msra.mxu0 0
      %1857 = vmatprep.subr.bf16.mxu0 0
      %1858 = vmatpush1.bf16.msra.mxu0 0
      %1859 = vmatprep.subr.bf16.mxu0 0
      %1860 = vmatpush1.bf16.msra.mxu0 0
      %1861 = vmatprep.subr.bf16.mxu0 0
      %1862 = vmatpush1.bf16.msra.mxu0 0
      %1863 = vmatprep.subr.bf16.mxu0 0
      %1864 = vmatpush1.bf16.msra.mxu0 0
      %1865 = vmatprep.mubr.bf16.mxu0 0
      %1866 = vmatmul.mubr.bf16.gmra.mrb[0].mxu0 %v1831
      %v1867 = vpop.f32.mrb[0].mxu0
      %v1868 = vadd.f32 %v1804, %v1867
      %v1869 = vpop.f32.mrb[0].mxu0
      %v1870 = vpop.f32.mrb[0].mxu0
      %v1871 = vpop.f32.mrb[0].mxu0
      %1872 = vdwg.mxu0
      %v1873 = vld [vmem:[%s811] sm:$0xf]
      %v1874 = vld [vmem:[%s811 + $0x4] sm:$0xf]
      %v1875 = vld [vmem:[%s811 + $0x8] sm:$0xf]
      %v1876 = vld [vmem:[%s811 + $0xc] sm:$0xf]
      %v1877 = vld [vmem:[%s811 + $0x10] sm:$0xf]
      %v1878 = vld [vmem:[%s811 + $0x14] sm:$0xf]
      %v1879 = vld [vmem:[%s811 + $0x18] sm:$0xf]
      %v1880 = vld [vmem:[%s811 + $0x1c] sm:$0xf]
      %v1881 = vld [vmem:[%s814] sm:$0x1]
      %v1883 = vlaneseq
      %v1884 = vshrl.u32 %v1883, 7
      %v1885 = vsub.s32 0, %v1884
      %v1886 = vrot.slane %v1881, %v1885
      %1889 = vrot.lane.b32.xlu0 %v1790, 64
      %v1890 = vpop.permute.xlu0 %1889
      %v1899 = vunpack.c.l.b16 %v1873
      %v1900 = vunpack.c.l.b16 %v1874
      %v1901 = vunpack.c.l.b16 %v1875
      %v1902 = vunpack.c.l.b16 %v1876
      %v1903 = vunpack.c.l.b16 %v1877
      %v1904 = vunpack.c.l.b16 %v1878
      %v1905 = vunpack.c.l.b16 %v1879
      %v1906 = vunpack.c.l.b16 %v1880
      %v1907 = vpack.c.b16 %v1900, %v1899
      %v1908 = vpack.c.b16 %v1902, %v1901
      %v1909 = vpack.c.b16 %v1904, %v1903
      %v1910 = vpack.c.b16 %v1906, %v1905
      %v1916 = vsel %vm971, %v1890, 0
      %1918 = vmatprep.subr.bf16.mxu0 0
      %1919 = vmatpush1.bf16.msra.mxu0 %v1907
      %1920 = vmatprep.subr.bf16.mxu0 0
      %1921 = vmatpush1.bf16.msra.mxu0 %v1908
      %1922 = vmatprep.subr.bf16.mxu0 0
      %1923 = vmatpush1.bf16.msra.mxu0 %v1909
      %1924 = vmatprep.subr.bf16.mxu0 0
      %1925 = vmatpush1.bf16.msra.mxu0 %v1910
      %1926 = vmatprep.subr.bf16.mxu0 0
      %1927 = vmatpush1.bf16.msra.mxu0 0
      %1928 = vmatprep.subr.bf16.mxu0 0
      %1929 = vmatpush1.bf16.msra.mxu0 0
      %1930 = vmatprep.subr.bf16.mxu0 0
      %1931 = vmatpush1.bf16.msra.mxu0 0
      %1932 = vmatprep.subr.bf16.mxu0 0
      %1933 = vmatpush1.bf16.msra.mxu0 0
      %1934 = vmatprep.subr.bf16.mxu0 0
      %1935 = vmatpush1.bf16.msra.mxu0 0
      %1936 = vmatprep.subr.bf16.mxu0 0
      %1937 = vmatpush1.bf16.msra.mxu0 0
      %1938 = vmatprep.subr.bf16.mxu0 0
      %1939 = vmatpush1.bf16.msra.mxu0 0
      %1940 = vmatprep.subr.bf16.mxu0 0
      %1941 = vmatpush1.bf16.msra.mxu0 0
      %1942 = vmatprep.subr.bf16.mxu0 0
      %1943 = vmatpush1.bf16.msra.mxu0 0
      %1944 = vmatprep.subr.bf16.mxu0 0
      %1945 = vmatpush1.bf16.msra.mxu0 0
      %1946 = vmatprep.subr.bf16.mxu0 0
      %1947 = vmatpush1.bf16.msra.mxu0 0
      %1948 = vmatprep.subr.bf16.mxu0 0
      %1949 = vmatpush1.bf16.msra.mxu0 0
      %1950 = vmatprep.mubr.bf16.mxu0 0
      %1951 = vmatmul.mubr.bf16.gmra.mrb[0].mxu0 %v1916
      %v1952 = vpop.f32.mrb[0].mxu0
      %v1953 = vadd.f32 %v1886, %v1952
      %v1954 = vpop.f32.mrb[0].mxu0
      %v1955 = vpop.f32.mrb[0].mxu0
      %v1956 = vpop.f32.mrb[0].mxu0
      %1957 = vdwg.mxu0
      %v1958 = vld [vmem:[%s817] sm:$0x1]
      %v1959 = vld [vmem:[%s820] sm:$0x1]
      %v1960 = vxor.u32 %v1868, 2147483648
      %v1961 = vmul.f32 %v1960, 1.442695
      %v1962 = vpow.pop %v1961
      %v1963 = vadd.f32 %v1962, 1.0
      %v1964 = vrcp.pop %v1963
      %v1965 = vmul.f32 1.0, %v1964
      %v1966 = vmul.f32 %v1721, %v1965
      %v1967 = vsub.f32 1.0, %v1965
      %v1968 = vmul.f32 %v1953, %v1967
      %v1969 = vadd.f32 %v1966, %v1968
      %v1970 = vsel %vm875, %v1969, 0.0
      %1971 = vadd.xlane.f32.xlu0 %v1970
      %v1972 = vpop.xlane.xlu0 %1971
      %v1973 = vmul.f32 %v1972, %v1689
      %v1974 = vsub.f32 %v1969, %v1973
      %v1975 = vmul.f32 %v1974, %v1974
      %v1976 = vsel %vm875, %v1975, 0.0
      %1977 = vadd.xlane.f32.xlu0 %v1976
      %v1978 = vpop.xlane.xlu0 %1977
      %v1979 = vmul.f32 %v1978, 0.032258064
      %v1980 = vrsqrt.pop %v1979
      %v1981 = vmul.f32 %v1979, %v1980
      %vm1982 = vcmp.eq.f32.partialorder %v1979, inf
      %v1983 = vsel %vm1982, %v1979, %v1981
      %vm1984 = vcmp.eq.f32.partialorder %v1979, 0.0
      %v1985 = vand.u32 %v1979, 2147483648
      %v1986 = vsel %vm1984, %v1985, %v1983
      %v1987 = vadd.f32 %v1986, 1e-06
      %v1988 = vrcp.pop %v1987
      %v1989 = vmul.f32 1.0, %v1988
      %v1990 = vmul.f32 %v1974, %v1989
      %v1992 = vlaneseq
      %v1993 = vshrl.u32 %v1992, 7
      %v1994 = vsub.s32 0, %v1993
      %v1995 = vrot.slane %v1958, %v1994
      %v1997 = vmul.f32 %v1995, %v1990
      %v1999 = vlaneseq
      %v2000 = vshrl.u32 %v1999, 7
      %v2001 = vsub.s32 0, %v2000
      %v2002 = vrot.slane %v1959, %v2001
      %v2004 = vadd.f32 %v1997, %v2002
      %2005 = vst.msk [vmem:[#allocation2] sm:$0xff] %vm875, %v2004
      %2006 = vst.msk [vmem:[%s828] sm:$0xff] %vm875, %v2004
      %p2007 = scmp.lt.s32.totalorder %s33, 1
      %s2008 = scalar_select %p2007, %s33, 1
      %p2009 = scmp.lt.s32.totalorder %s32, 1
      %s2010 = scalar_select %p2009, %s32, 1
      %s2011 = smul.addr %s2008, 2
      %s2012 = sadd.s32 %s2010, %s2011
      %s2013 = smul.addr %s2012, 8
      %s2014 = scalar_lea.vmem %s17, %s2013
      // Predicated region
      $region93: #{encoder_forward.1} parent=87 // pred_check
        %p2015 = pneg %p502
      $region94: #{encoder_forward.1} parent=87 // pred_check_branch
        %2017 = sbr.rel (%p2015) target = $region96
      $region95: #{encoder_forward.1} parent=87 // pred_region
        _
      $region96: #{encoder_forward.1} parent=87 // pred_fallthru
        _
    $region88: #{encoder_forward.1} parent=5 // pred_fallthru
      _
    %p2018 = scmp.le.s32.totalorder 2, %s23
    // Predicated region
    $region97: #{encoder_forward.1} parent=5 // pred_check
      %p2019 = pneg %p2018
    $region98: #{encoder_forward.1} parent=5 // pred_check_branch
      %2021 = sbr.rel (%p2019) target = $region100
    $region99: #{encoder_forward.1} parent=5 // pred_region
      %s2022 = ssub.s32 %s23, 2
      // Predicated region
      $region101: #{encoder_forward.1} parent=99 // pred_check
        %p2023 = pneg %p508
      $region102: #{encoder_forward.1} parent=99 // pred_check_branch
        %2025 = sbr.rel (%p2023) target = $region104
      $region103: #{encoder_forward.1} parent=99 // pred_region
        %p2026 = scmp.lt.s32.totalorder %s35, 1
        %s2027 = scalar_select %p2026, %s35, 1
        %p2028 = scmp.lt.s32.totalorder %s34, 1
        %s2029 = scalar_select %p2028, %s34, 1
        %s2030 = smul.addr %s2027, 2
        %s2031 = sadd.s32 %s2029, %s2030
        %s2032 = smul.addr %s2031, 8
        %s2033 = scalar_lea.vmem %s17, %s2032
      $region104: #{encoder_forward.1} parent=99 // pred_fallthru
        _
    $region100: #{encoder_forward.1} parent=5 // pred_fallthru
      _
  $region6: #{encoder_forward.1} parent=0 // loop_footer
    %s27 = sadd.s32 1, %s23
  $region7: #{encoder_forward.1} parent=0 // loop_footer_branch
    %22 = sbr.rel target = $region3
  $region8: #{encoder_forward.1} parent=0 // loop_exit
    _

</llo_original>
